<compile_context>
chip_gen: v5e
topology: v5e:2x2
jax: 0.10.0
libtpu: 0.0.40
codegen_flags: <defaults>
</compile_context>

<pallas_src>
import math
from functools import partial

import numpy as np
import jax
import jax.numpy as jnp
from jax.experimental import pallas as pl
from jax.experimental.pallas import tpu as pltpu

LANE = 128


def make_mha_kernel(Dp, num_heads, Bt, S, T):
    H = num_heads
    Dhp = Dp // H  # padded per-head width (lane-aligned, multiple of 32 for Dp=128/H=4)

    def kernel(q_ref, k_ref, v_ref, mask_ref,
               wq_ref, wk_ref, wv_ref, wh_ref,
               bq_ref, bk_ref, bv_ref, bh_ref,
               out_ref):
        RS = Bt * S

        # Projections: bf16 x bf16 -> fp32 accumulate, bias add in fp32, single bf16 cast.
        # 1/sqrt(D/H) is already folded into wq/bq.
        Q = (jnp.dot(q_ref[...].astype(jnp.bfloat16), wq_ref[...],
                     preferred_element_type=jnp.float32) + bq_ref[...]).astype(jnp.bfloat16)
        K = (jnp.dot(k_ref[...].astype(jnp.bfloat16), wk_ref[...],
                     preferred_element_type=jnp.float32) + bk_ref[...]).astype(jnp.bfloat16)
        V = (jnp.dot(v_ref[...].astype(jnp.bfloat16), wv_ref[...],
                     preferred_element_type=jnp.float32) + bv_ref[...]).astype(jnp.bfloat16)

        # Leading-dim split only (S, T are multiples of 8) -> no tile-boundary relayout.
        Q3 = Q.reshape(Bt, S, Dp)
        K3 = K.reshape(Bt, T, Dp)
        V3 = V.reshape(Bt, T, Dp)

        # Additive mask; broadcast hoisted out of the unrolled head loop.
        mask_b = mask_ref[...][None, :, :]                      # (1, S, T) fp32

        out_acc = jnp.zeros((RS, Dp), jnp.float32)

        # H is small & static -> unrolled. Each head is batched over Bt with single-batch-dim
        # einsums (same contraction pattern as the flash-attention reference kernel).
        for h in range(H):
            sl = slice(h * Dhp, (h + 1) * Dhp)                  # 32-lane-aligned head slice
            Qh = Q3[:, :, sl]                                   # (Bt, S, Dhp) bf16
            Kh = K3[:, :, sl]                                   # (Bt, T, Dhp) bf16
            Vh = V3[:, :, sl]                                   # (Bt, T, Dhp) bf16

            s = jnp.einsum("bsd,btd->bst", Qh, Kh,
                           preferred_element_type=jnp.float32)  # (Bt, S, T) fp32
            s = s + mask_b
            s = s - jnp.max(s, axis=-1, keepdims=True)          # stable softmax (fp32)
            p = jnp.exp(s)
            p = p * pl.reciprocal(jnp.sum(p, axis=-1, keepdims=True), approx=True)

            ctx = jnp.einsum("bst,btd->bsd", p.astype(jnp.bfloat16), Vh,
                             preferred_element_type=jnp.float32)  # (Bt, S, Dhp) fp32

            # Accumulate this head's output-projection contribution (no lane concatenation).
            out_acc = out_acc + jnp.dot(
                ctx.reshape(RS, Dhp).astype(jnp.bfloat16), wh_ref[h],
                preferred_element_type=jnp.float32)

        out_ref[...] = (out_acc + bh_ref[...]).astype(out_ref.dtype)  # lane-dense 128-wide store

    return kernel


def _vmem_bytes(bt, S, T, Dp, H, in_isz, out_isz):
    """Rough per-grid-step VMEM estimate (double-buffered blocks + in-kernel temporaries)."""
    act_in = 2 * (bt * S + 2 * bt * T) * Dp * in_isz      # q/k/v input blocks (x2 buffers)
    act_out = 2 * bt * S * Dp * out_isz                   # output block (x2 buffers)
    weights = 2 * (4 * Dp * Dp * 2 + 4 * Dp * 4 + S * T * 4)
    tmp = (bt * S + 2 * bt * T) * Dp * 2                  # bf16 Q/K/V
    tmp += 2 * bt * S * T * 4                             # fp32 scores + probs
    tmp += bt * S * Dp * 4                                # fp32 output accumulator
    tmp += bt * S * (Dp // H) * 4                         # fp32 per-head context
    return act_in + act_out + weights + 2 * tmp           # 2x slack for relayouts / headroom


def _pick_batch_tile(N, S, T, Dp, H, in_isz, out_isz,
                     budget_bytes=24 * 1024 * 1024, max_rows=1024):
    """Largest batch tile that fits the VMEM budget; prefers minimal batch padding, then the
    biggest tile (fills the MXU M dimension, amortizes the ~0.35us per-grid-step overhead)."""
    best_bt, best_cost = 1, (N, -1)
    for bt in range(1, N + 1):
        if bt * max(S, T) > max_rows:
            break
        if _vmem_bytes(bt, S, T, Dp, H, in_isz, out_isz) > budget_bytes:
            break
        n_pad = -(-N // bt) * bt
        cost = (n_pad, -bt)
        if cost <= best_cost:
            best_bt, best_cost = bt, cost
    return best_bt


def prepare_params(params, embed_dim, num_heads):
    """One-time host-side prep: transpose PyTorch (out,in) weights, pad D -> Dp (multiple of 128)
    with head-strided column placement, fold 1/sqrt(D/H) into Wq/bq, split head_proj per head,
    cast weights to bf16 (biases stay fp32)."""
    D = embed_dim
    H = num_heads
    Dh = D // H
    Dp = ((D + LANE - 1) // LANE) * LANE
    Dhp = Dp // H
    scale = 1.0 / math.sqrt(D / H)

    def pad_in_proj(w, b, s=1.0):
        wt = jnp.asarray(w, jnp.float32).T * s            # (in=D, out=D)
        bv = jnp.asarray(b, jnp.float32) * s
        wp = jnp.zeros((Dp, Dp), jnp.float32)
        bp = jnp.zeros((Dp,), jnp.float32)
        for h in range(H):
            wp = wp.at[:D, h * Dhp:h * Dhp + Dh].set(wt[:, h * Dh:(h + 1) * Dh])
            bp = bp.at[h * Dhp:h * Dhp + Dh].set(bv[h * Dh:(h + 1) * Dh])
        return wp.astype(jnp.bfloat16), bp.reshape(1, Dp)

    wq, bq = pad_in_proj(params["wq"], params["bq"], scale)
    wk, bk = pad_in_proj(params["wk"], params["bk"])
    wv, bv = pad_in_proj(params["wv"], params["bv"])

    wh_t = jnp.asarray(params["wh"], jnp.float32).T       # (in=D, out=D)
    wh_heads = jnp.zeros((H, Dhp, Dp), jnp.float32)
    for h in range(H):
        wh_heads = wh_heads.at[h, :Dh, :D].set(wh_t[h * Dh:(h + 1) * Dh, :])
    bh = jnp.zeros((Dp,), jnp.float32).at[:D].set(jnp.asarray(params["bh"], jnp.float32))

    return {"wq": wq, "wk": wk, "wv": wv, "wh": wh_heads.astype(jnp.bfloat16),
            "bq": bq, "bk": bk, "bv": bv, "bh": bh.reshape(1, Dp)}


@partial(jax.jit, static_argnames=("num_heads",))
def multi_head_attention(query, key, value, attn_mask, prepared, num_heads):
    """query: (N, S, D), key/value: (N, T, D), attn_mask: (S, T) in {0,1} or None."""
    N, S, D = query.shape
    _, T, _ = value.shape
    assert key.shape == value.shape
    H = num_heads
    Dp = prepared["wq"].shape[0]          # padded embed dim (multiple of 128)
    Dhp = Dp // H

    bt = _pick_batch_tile(N, S, T, Dp, H,
                          in_isz=query.dtype.itemsize, out_isz=query.dtype.itemsize)
    n_pad = -(-N // bt) * bt

    # Pad feature dim to Dp, batch to n_pad, and flatten to 2-D rows (cheap XLA pad/reshape,
    # outside the kernel) so every block is lane- and sublane-dense.
    def pad_flat(x, L):
        x = jnp.pad(x, ((0, n_pad - N), (0, 0), (0, Dp - D)))
        return x.reshape(n_pad * L, Dp)

    q2 = pad_flat(query, S)
    k2 = pad_flat(key, T)
    v2 = pad_flat(value, T)

    if attn_mask is None:
        mask_add = jnp.zeros((S, T), jnp.float32)
    else:
        mask_add = (1.0 - attn_mask.astype(jnp.float32)) * (-1e9)

    kernel = make_mha_kernel(Dp, H, bt, S, T)

    row_map = lambda n: (n, 0)
    const2 = lambda n: (0, 0)
    const3 = lambda n: (0, 0, 0)

    out = pl.pallas_call(
        kernel,
        out_shape=jax.ShapeDtypeStruct((n_pad * S, Dp), query.dtype),
        grid_spec=pltpu.PrefetchScalarGridSpec(
            num_scalar_prefetch=0,
            grid=(n_pad // bt,),
            in_specs=[
                pl.BlockSpec((bt * S, Dp), row_map),   # query rows
                pl.BlockSpec((bt * T, Dp), row_map),   # key rows
                pl.BlockSpec((bt * T, Dp), row_map),   # value rows
                pl.BlockSpec((S, T), const2),          # additive mask (grid-constant)
                pl.BlockSpec((Dp, Dp), const2),        # wq^T * scale (bf16, padded)
                pl.BlockSpec((Dp, Dp), const2),        # wk^T (bf16, padded)
                pl.BlockSpec((Dp, Dp), const2),        # wv^T (bf16, padded)
                pl.BlockSpec((H, Dhp, Dp), const3),    # per-head head_proj weights (bf16)
                pl.BlockSpec((1, Dp), const2),         # bq * scale
                pl.BlockSpec((1, Dp), const2),         # bk
                pl.BlockSpec((1, Dp), const2),         # bv
                pl.BlockSpec((1, Dp), const2),         # bh
            ],
            out_specs=pl.BlockSpec((bt * S, Dp), row_map),
        ),
        compiler_params=pltpu.CompilerParams(
            dimension_semantics=("parallel",),
            vmem_limit_bytes=32 * 1024 * 1024),
    )(q2, k2, v2, mask_add,
      prepared["wq"], prepared["wk"], prepared["wv"], prepared["wh"],
      prepared["bq"], prepared["bk"], prepared["bv"], prepared["bh"])

    return out.reshape(n_pad, S, Dp)[:N, :, :D]


def reference_mha(query, key, value, attn_mask, params, num_heads):
    """Pure-JAX fp32 reference mirroring the PyTorch forward (eval-mode dropout)."""
    N, S, D = query.shape
    _, T, _ = value.shape
    H = num_heads
    Dh = D // H

    def lin(x, w, b):
        return jnp.einsum("nsd,od->nso", x, w) + b

    q = lin(query, params["wq"], params["bq"]).reshape(N, S, H, Dh)
    k = lin(key, params["wk"], params["bk"]).reshape(N, T, H, Dh)
    v = lin(value, params["wv"], params["bv"]).reshape(N, T, H, Dh)

    dot = jnp.einsum("NSHD,NTHD->NHST", q, k) / np.sqrt(D / H)
    if attn_mask is not None:
        dot = dot + (1.0 - attn_mask) * (-1e9)
    attn = jax.nn.softmax(dot, axis=-1)
    out = jnp.einsum("NHST,NTHD->NSHD", attn, v).reshape(N, S, D)
    return jnp.einsum("nsd,od->nso", out, params["wh"]) + params["bh"]


def init_params(key, embed_dim):
    D = embed_dim
    ks = jax.random.split(key, 8)
    bound = 1.0 / math.sqrt(D)
    u = lambda k, shape: jax.random.uniform(k, shape, jnp.float32, -bound, bound)
    return {
        "wq": u(ks[0], (D, D)), "bq": u(ks[1], (D,)),
        "wk": u(ks[2], (D, D)), "bk": u(ks[3], (D,)),
        "wv": u(ks[4], (D, D)), "bv": u(ks[5], (D,)),
        "wh": u(ks[6], (D, D)), "bh": u(ks[7], (D,)),
    }


if __name__ == "__main__":
    N, S, T, D, H = 8, 8, 8, 32, 4

    root = jax.random.PRNGKey(0)
    kq, kk, kv, kp = jax.random.split(root, 4)

    query = jax.random.normal(kq, (N, S, D), jnp.float32)
    key_in = jax.random.normal(kk, (N, T, D), jnp.float32)
    value = jax.random.normal(kv, (N, T, D), jnp.float32)
    params = init_params(kp, D)

    # Causal 0/1 attention mask (S, T), broadcast over batch and heads like the PyTorch module.
    attn_mask = jnp.tril(jnp.ones((S, T), jnp.float32))

    prepared = prepare_params(params, D, H)  # one-time: transpose, pad, scale fold, bf16 cast

    out = multi_head_attention(query, key_in, value, attn_mask, prepared, H)
    out = jax.block_until_ready(out)

    ref = jax.block_until_ready(reference_mha(query, key_in, value, attn_mask, params, H))

    # bf16 MXU inputs + approx reciprocal -> loosened tolerance vs the fp32 reference
    # (fp32 softmax and fp32 accumulation keep the error bounded).
    o = np.asarray(out)
    r = np.asarray(ref)
    if not np.allclose(o, r, atol=5e-2, rtol=5e-2):
        raise AssertionError(
            f"Pallas kernel output does not match JAX reference "
            f"(max abs err {float(np.max(np.abs(o - r))):.3e})")

    print("KERNEL_OK")
</pallas_src>

<mosaic_0001>
module attributes {stable_mosaic.version = 11 : i64} {
  func.func @kernel(%arg0: i32, %arg1: memref<64x128xf32, #tpu.memory_space<vmem>>, %arg2: memref<64x128xf32, #tpu.memory_space<vmem>>, %arg3: memref<64x128xf32, #tpu.memory_space<vmem>>, %arg4: memref<8x8xf32, #tpu.memory_space<vmem>>, %arg5: memref<128x128xbf16, #tpu.memory_space<vmem>>, %arg6: memref<128x128xbf16, #tpu.memory_space<vmem>>, %arg7: memref<128x128xbf16, #tpu.memory_space<vmem>>, %arg8: memref<4x32x128xbf16, #tpu.memory_space<vmem>>, %arg9: memref<1x128xf32, #tpu.memory_space<vmem>>, %arg10: memref<1x128xf32, #tpu.memory_space<vmem>>, %arg11: memref<1x128xf32, #tpu.memory_space<vmem>>, %arg12: memref<1x128xf32, #tpu.memory_space<vmem>>, %arg13: memref<64x128xf32, #tpu.memory_space<vmem>>) attributes {dimension_semantics = [#tpu.dimension_semantics<parallel>], iteration_bounds = array<i64: 1>, scalar_prefetch = 0 : i64, scratch_operands = 0 : i64, tpu.core_type = #tpu.core_type<tc>, window_params = [{transform_indices = @transform_0, window_bounds = array<i64: 64, 128>}, {transform_indices = @transform_1, window_bounds = array<i64: 64, 128>}, {transform_indices = @transform_2, window_bounds = array<i64: 64, 128>}, {pipeline_mode = #tpu.pipeline_mode<synchronous>, transform_indices = @transform_3, window_bounds = array<i64: 8, 8>}, {pipeline_mode = #tpu.pipeline_mode<synchronous>, transform_indices = @transform_4, window_bounds = array<i64: 128, 128>}, {pipeline_mode = #tpu.pipeline_mode<synchronous>, transform_indices = @transform_5, window_bounds = array<i64: 128, 128>}, {pipeline_mode = #tpu.pipeline_mode<synchronous>, transform_indices = @transform_6, window_bounds = array<i64: 128, 128>}, {pipeline_mode = #tpu.pipeline_mode<synchronous>, transform_indices = @transform_7, window_bounds = array<i64: 4, 32, 128>}, {pipeline_mode = #tpu.pipeline_mode<synchronous>, transform_indices = @transform_8, window_bounds = array<i64: 1, 128>}, {pipeline_mode = #tpu.pipeline_mode<synchronous>, transform_indices = @transform_9, window_bounds = array<i64: 1, 128>}, {pipeline_mode = #tpu.pipeline_mode<synchronous>, transform_indices = @transform_10, window_bounds = array<i64: 1, 128>}, {pipeline_mode = #tpu.pipeline_mode<synchronous>, transform_indices = @transform_11, window_bounds = array<i64: 1, 128>}, {transform_indices = @transform_12, window_bounds = array<i64: 64, 128>}]} {
    %c0 = arith.constant 0 : index
    %c0_0 = arith.constant 0 : index
    %0 = vector.load %arg1[%c0, %c0_0] : memref<64x128xf32, #tpu.memory_space<vmem>>, vector<64x128xf32>
    %1 = arith.truncf %0 : vector<64x128xf32> to vector<64x128xbf16>
    %c0_1 = arith.constant 0 : index
    %c0_2 = arith.constant 0 : index
    %2 = vector.load %arg5[%c0_1, %c0_2] : memref<128x128xbf16, #tpu.memory_space<vmem>>, vector<128x128xbf16>
    %cst = arith.constant dense<0.000000e+00> : vector<64x128xf32>
    %3 = tpu.matmul %1, %2, %cst {dimension_numbers = #tpu.dot_dimension_numbers<[1], [0], [0], [1], [0, 0, 1, 1], [], []>} : vector<64x128xbf16>, vector<128x128xbf16>, vector<64x128xf32> -> vector<64x128xf32>
    %c0_3 = arith.constant 0 : index
    %c0_4 = arith.constant 0 : index
    %4 = vector.load %arg9[%c0_3, %c0_4] : memref<1x128xf32, #tpu.memory_space<vmem>>, vector<1x128xf32>
    %5 = vector.broadcast %4 : vector<1x128xf32> to vector<64x128xf32>
    %6 = arith.addf %3, %5 : vector<64x128xf32>
    %7 = arith.truncf %6 : vector<64x128xf32> to vector<64x128xbf16>
    %c0_5 = arith.constant 0 : index
    %c0_6 = arith.constant 0 : index
    %8 = vector.load %arg2[%c0_5, %c0_6] : memref<64x128xf32, #tpu.memory_space<vmem>>, vector<64x128xf32>
    %9 = arith.truncf %8 : vector<64x128xf32> to vector<64x128xbf16>
    %c0_7 = arith.constant 0 : index
    %c0_8 = arith.constant 0 : index
    %10 = vector.load %arg6[%c0_7, %c0_8] : memref<128x128xbf16, #tpu.memory_space<vmem>>, vector<128x128xbf16>
    %cst_9 = arith.constant dense<0.000000e+00> : vector<64x128xf32>
    %11 = tpu.matmul %9, %10, %cst_9 {dimension_numbers = #tpu.dot_dimension_numbers<[1], [0], [0], [1], [0, 0, 1, 1], [], []>} : vector<64x128xbf16>, vector<128x128xbf16>, vector<64x128xf32> -> vector<64x128xf32>
    %c0_10 = arith.constant 0 : index
    %c0_11 = arith.constant 0 : index
    %12 = vector.load %arg10[%c0_10, %c0_11] : memref<1x128xf32, #tpu.memory_space<vmem>>, vector<1x128xf32>
    %13 = vector.broadcast %12 : vector<1x128xf32> to vector<64x128xf32>
    %14 = arith.addf %11, %13 : vector<64x128xf32>
    %15 = arith.truncf %14 : vector<64x128xf32> to vector<64x128xbf16>
    %c0_12 = arith.constant 0 : index
    %c0_13 = arith.constant 0 : index
    %16 = vector.load %arg3[%c0_12, %c0_13] : memref<64x128xf32, #tpu.memory_space<vmem>>, vector<64x128xf32>
    %17 = arith.truncf %16 : vector<64x128xf32> to vector<64x128xbf16>
    %c0_14 = arith.constant 0 : index
    %c0_15 = arith.constant 0 : index
    %18 = vector.load %arg7[%c0_14, %c0_15] : memref<128x128xbf16, #tpu.memory_space<vmem>>, vector<128x128xbf16>
    %cst_16 = arith.constant dense<0.000000e+00> : vector<64x128xf32>
    %19 = tpu.matmul %17, %18, %cst_16 {dimension_numbers = #tpu.dot_dimension_numbers<[1], [0], [0], [1], [0, 0, 1, 1], [], []>} : vector<64x128xbf16>, vector<128x128xbf16>, vector<64x128xf32> -> vector<64x128xf32>
    %c0_17 = arith.constant 0 : index
    %c0_18 = arith.constant 0 : index
    %20 = vector.load %arg11[%c0_17, %c0_18] : memref<1x128xf32, #tpu.memory_space<vmem>>, vector<1x128xf32>
    %21 = vector.broadcast %20 : vector<1x128xf32> to vector<64x128xf32>
    %22 = arith.addf %19, %21 : vector<64x128xf32>
    %23 = arith.truncf %22 : vector<64x128xf32> to vector<64x128xbf16>
    %24 = vector.shape_cast %7 : vector<64x128xbf16> to vector<8x8x128xbf16>
    %25 = vector.shape_cast %15 : vector<64x128xbf16> to vector<8x8x128xbf16>
    %26 = vector.shape_cast %23 : vector<64x128xbf16> to vector<8x8x128xbf16>
    %c0_19 = arith.constant 0 : index
    %c0_20 = arith.constant 0 : index
    %27 = vector.load %arg4[%c0_19, %c0_20] : memref<8x8xf32, #tpu.memory_space<vmem>>, vector<8x8xf32>
    %28 = vector.shape_cast %27 : vector<8x8xf32> to vector<1x8x8xf32>
    %cst_21 = arith.constant 0.000000e+00 : f32
    %29 = vector.broadcast %cst_21 : f32 to vector<64x128xf32>
    %30 = vector.extract_strided_slice %24 {offsets = [0, 0, 0], sizes = [8, 8, 32], strides = [1, 1, 1]} : vector<8x8x128xbf16> to vector<8x8x32xbf16>
    %31 = vector.extract_strided_slice %25 {offsets = [0, 0, 0], sizes = [8, 8, 32], strides = [1, 1, 1]} : vector<8x8x128xbf16> to vector<8x8x32xbf16>
    %32 = vector.extract_strided_slice %26 {offsets = [0, 0, 0], sizes = [8, 8, 32], strides = [1, 1, 1]} : vector<8x8x128xbf16> to vector<8x8x32xbf16>
    "tpu.trace_start"() <{level = 10 : i32, message = "bsd,btd->bst"}> : () -> ()
    %cst_22 = arith.constant dense<0.000000e+00> : vector<8x8x8xf32>
    %33 = tpu.matmul %30, %31, %cst_22 {dimension_numbers = #tpu.dot_dimension_numbers<[2], [2], [1], [1], [0, 0, 0, 1, 1, 1], [0], [0]>} : vector<8x8x32xbf16>, vector<8x8x32xbf16>, vector<8x8x8xf32> -> vector<8x8x8xf32>
    "tpu.trace_stop"() : () -> ()
    %34 = vector.broadcast %28 : vector<1x8x8xf32> to vector<8x8x8xf32>
    %35 = arith.addf %33, %34 : vector<8x8x8xf32>
    %cst_23 = arith.constant dense<0xFF800000> : vector<8x8xf32>
    %36 = vector.multi_reduction <maximumf>, %35, %cst_23 [2] : vector<8x8x8xf32> to vector<8x8xf32>
    %37 = vector.shape_cast %36 : vector<8x8xf32> to vector<8x8x1xf32>
    %38 = vector.broadcast %37 : vector<8x8x1xf32> to vector<8x8x8xf32>
    %39 = arith.subf %35, %38 : vector<8x8x8xf32>
    %40 = math.exp %39 : vector<8x8x8xf32>
    %cst_24 = arith.constant dense<0.000000e+00> : vector<8x8xf32>
    %41 = vector.multi_reduction <add>, %40, %cst_24 [2] : vector<8x8x8xf32> to vector<8x8xf32>
    %42 = vector.shape_cast %41 : vector<8x8xf32> to vector<8x8x1xf32>
    %43 = tpu.reciprocal %42 {approx = true} : vector<8x8x1xf32> -> vector<8x8x1xf32>
    %44 = vector.broadcast %43 : vector<8x8x1xf32> to vector<8x8x8xf32>
    %45 = arith.mulf %40, %44 : vector<8x8x8xf32>
    %46 = arith.truncf %45 : vector<8x8x8xf32> to vector<8x8x8xbf16>
    "tpu.trace_start"() <{level = 10 : i32, message = "bst,btd->bsd"}> : () -> ()
    %cst_25 = arith.constant dense<0.000000e+00> : vector<8x8x32xf32>
    %47 = tpu.matmul %46, %32, %cst_25 {dimension_numbers = #tpu.dot_dimension_numbers<[2], [1], [1], [2], [0, 0, 0, 1, 1, 2], [0], [0]>} : vector<8x8x8xbf16>, vector<8x8x32xbf16>, vector<8x8x32xf32> -> vector<8x8x32xf32>
    "tpu.trace_stop"() : () -> ()
    %48 = vector.shape_cast %47 : vector<8x8x32xf32> to vector<64x32xf32>
    %49 = arith.truncf %48 : vector<64x32xf32> to vector<64x32xbf16>
    %c0_26 = arith.constant 0 : index
    %c0_27 = arith.constant 0 : index
    %c0_28 = arith.constant 0 : index
    %50 = vector.load %arg8[%c0_26, %c0_27, %c0_28] : memref<4x32x128xbf16, #tpu.memory_space<vmem>>, vector<1x32x128xbf16>
    %51 = vector.shape_cast %50 : vector<1x32x128xbf16> to vector<32x128xbf16>
    %cst_29 = arith.constant dense<0.000000e+00> : vector<64x128xf32>
    %52 = tpu.matmul %49, %51, %cst_29 {dimension_numbers = #tpu.dot_dimension_numbers<[1], [0], [0], [1], [0, 0, 1, 1], [], []>} : vector<64x32xbf16>, vector<32x128xbf16>, vector<64x128xf32> -> vector<64x128xf32>
    %53 = arith.addf %29, %52 : vector<64x128xf32>
    %54 = vector.extract_strided_slice %24 {offsets = [0, 0, 32], sizes = [8, 8, 32], strides = [1, 1, 1]} : vector<8x8x128xbf16> to vector<8x8x32xbf16>
    %55 = vector.extract_strided_slice %25 {offsets = [0, 0, 32], sizes = [8, 8, 32], strides = [1, 1, 1]} : vector<8x8x128xbf16> to vector<8x8x32xbf16>
    %56 = vector.extract_strided_slice %26 {offsets = [0, 0, 32], sizes = [8, 8, 32], strides = [1, 1, 1]} : vector<8x8x128xbf16> to vector<8x8x32xbf16>
    "tpu.trace_start"() <{level = 10 : i32, message = "bsd,btd->bst"}> : () -> ()
    %cst_30 = arith.constant dense<0.000000e+00> : vector<8x8x8xf32>
    %57 = tpu.matmul %54, %55, %cst_30 {dimension_numbers = #tpu.dot_dimension_numbers<[2], [2], [1], [1], [0, 0, 0, 1, 1, 1], [0], [0]>} : vector<8x8x32xbf16>, vector<8x8x32xbf16>, vector<8x8x8xf32> -> vector<8x8x8xf32>
    "tpu.trace_stop"() : () -> ()
    %58 = vector.broadcast %28 : vector<1x8x8xf32> to vector<8x8x8xf32>
    %59 = arith.addf %57, %58 : vector<8x8x8xf32>
    %cst_31 = arith.constant dense<0xFF800000> : vector<8x8xf32>
    %60 = vector.multi_reduction <maximumf>, %59, %cst_31 [2] : vector<8x8x8xf32> to vector<8x8xf32>
    %61 = vector.shape_cast %60 : vector<8x8xf32> to vector<8x8x1xf32>
    %62 = vector.broadcast %61 : vector<8x8x1xf32> to vector<8x8x8xf32>
    %63 = arith.subf %59, %62 : vector<8x8x8xf32>
    %64 = math.exp %63 : vector<8x8x8xf32>
    %cst_32 = arith.constant dense<0.000000e+00> : vector<8x8xf32>
    %65 = vector.multi_reduction <add>, %64, %cst_32 [2] : vector<8x8x8xf32> to vector<8x8xf32>
    %66 = vector.shape_cast %65 : vector<8x8xf32> to vector<8x8x1xf32>
    %67 = tpu.reciprocal %66 {approx = true} : vector<8x8x1xf32> -> vector<8x8x1xf32>
    %68 = vector.broadcast %67 : vector<8x8x1xf32> to vector<8x8x8xf32>
    %69 = arith.mulf %64, %68 : vector<8x8x8xf32>
    %70 = arith.truncf %69 : vector<8x8x8xf32> to vector<8x8x8xbf16>
    "tpu.trace_start"() <{level = 10 : i32, message = "bst,btd->bsd"}> : () -> ()
    %cst_33 = arith.constant dense<0.000000e+00> : vector<8x8x32xf32>
    %71 = tpu.matmul %70, %56, %cst_33 {dimension_numbers = #tpu.dot_dimension_numbers<[2], [1], [1], [2], [0, 0, 0, 1, 1, 2], [0], [0]>} : vector<8x8x8xbf16>, vector<8x8x32xbf16>, vector<8x8x32xf32> -> vector<8x8x32xf32>
    "tpu.trace_stop"() : () -> ()
    %72 = vector.shape_cast %71 : vector<8x8x32xf32> to vector<64x32xf32>
    %73 = arith.truncf %72 : vector<64x32xf32> to vector<64x32xbf16>
    %c1 = arith.constant 1 : index
    %c0_34 = arith.constant 0 : index
    %c0_35 = arith.constant 0 : index
    %74 = vector.load %arg8[%c1, %c0_34, %c0_35] : memref<4x32x128xbf16, #tpu.memory_space<vmem>>, vector<1x32x128xbf16>
    %75 = vector.shape_cast %74 : vector<1x32x128xbf16> to vector<32x128xbf16>
    %cst_36 = arith.constant dense<0.000000e+00> : vector<64x128xf32>
    %76 = tpu.matmul %73, %75, %cst_36 {dimension_numbers = #tpu.dot_dimension_numbers<[1], [0], [0], [1], [0, 0, 1, 1], [], []>} : vector<64x32xbf16>, vector<32x128xbf16>, vector<64x128xf32> -> vector<64x128xf32>
    %77 = arith.addf %53, %76 : vector<64x128xf32>
    %78 = vector.extract_strided_slice %24 {offsets = [0, 0, 64], sizes = [8, 8, 32], strides = [1, 1, 1]} : vector<8x8x128xbf16> to vector<8x8x32xbf16>
    %79 = vector.extract_strided_slice %25 {offsets = [0, 0, 64], sizes = [8, 8, 32], strides = [1, 1, 1]} : vector<8x8x128xbf16> to vector<8x8x32xbf16>
    %80 = vector.extract_strided_slice %26 {offsets = [0, 0, 64], sizes = [8, 8, 32], strides = [1, 1, 1]} : vector<8x8x128xbf16> to vector<8x8x32xbf16>
    "tpu.trace_start"() <{level = 10 : i32, message = "bsd,btd->bst"}> : () -> ()
    %cst_37 = arith.constant dense<0.000000e+00> : vector<8x8x8xf32>
    %81 = tpu.matmul %78, %79, %cst_37 {dimension_numbers = #tpu.dot_dimension_numbers<[2], [2], [1], [1], [0, 0, 0, 1, 1, 1], [0], [0]>} : vector<8x8x32xbf16>, vector<8x8x32xbf16>, vector<8x8x8xf32> -> vector<8x8x8xf32>
    "tpu.trace_stop"() : () -> ()
    %82 = vector.broadcast %28 : vector<1x8x8xf32> to vector<8x8x8xf32>
    %83 = arith.addf %81, %82 : vector<8x8x8xf32>
    %cst_38 = arith.constant dense<0xFF800000> : vector<8x8xf32>
    %84 = vector.multi_reduction <maximumf>, %83, %cst_38 [2] : vector<8x8x8xf32> to vector<8x8xf32>
    %85 = vector.shape_cast %84 : vector<8x8xf32> to vector<8x8x1xf32>
    %86 = vector.broadcast %85 : vector<8x8x1xf32> to vector<8x8x8xf32>
    %87 = arith.subf %83, %86 : vector<8x8x8xf32>
    %88 = math.exp %87 : vector<8x8x8xf32>
    %cst_39 = arith.constant dense<0.000000e+00> : vector<8x8xf32>
    %89 = vector.multi_reduction <add>, %88, %cst_39 [2] : vector<8x8x8xf32> to vector<8x8xf32>
    %90 = vector.shape_cast %89 : vector<8x8xf32> to vector<8x8x1xf32>
    %91 = tpu.reciprocal %90 {approx = true} : vector<8x8x1xf32> -> vector<8x8x1xf32>
    %92 = vector.broadcast %91 : vector<8x8x1xf32> to vector<8x8x8xf32>
    %93 = arith.mulf %88, %92 : vector<8x8x8xf32>
    %94 = arith.truncf %93 : vector<8x8x8xf32> to vector<8x8x8xbf16>
    "tpu.trace_start"() <{level = 10 : i32, message = "bst,btd->bsd"}> : () -> ()
    %cst_40 = arith.constant dense<0.000000e+00> : vector<8x8x32xf32>
    %95 = tpu.matmul %94, %80, %cst_40 {dimension_numbers = #tpu.dot_dimension_numbers<[2], [1], [1], [2], [0, 0, 0, 1, 1, 2], [0], [0]>} : vector<8x8x8xbf16>, vector<8x8x32xbf16>, vector<8x8x32xf32> -> vector<8x8x32xf32>
    "tpu.trace_stop"() : () -> ()
    %96 = vector.shape_cast %95 : vector<8x8x32xf32> to vector<64x32xf32>
    %97 = arith.truncf %96 : vector<64x32xf32> to vector<64x32xbf16>
    %c2 = arith.constant 2 : index
    %c0_41 = arith.constant 0 : index
    %c0_42 = arith.constant 0 : index
    %98 = vector.load %arg8[%c2, %c0_41, %c0_42] : memref<4x32x128xbf16, #tpu.memory_space<vmem>>, vector<1x32x128xbf16>
    %99 = vector.shape_cast %98 : vector<1x32x128xbf16> to vector<32x128xbf16>
    %cst_43 = arith.constant dense<0.000000e+00> : vector<64x128xf32>
    %100 = tpu.matmul %97, %99, %cst_43 {dimension_numbers = #tpu.dot_dimension_numbers<[1], [0], [0], [1], [0, 0, 1, 1], [], []>} : vector<64x32xbf16>, vector<32x128xbf16>, vector<64x128xf32> -> vector<64x128xf32>
    %101 = arith.addf %77, %100 : vector<64x128xf32>
    %102 = vector.extract_strided_slice %24 {offsets = [0, 0, 96], sizes = [8, 8, 32], strides = [1, 1, 1]} : vector<8x8x128xbf16> to vector<8x8x32xbf16>
    %103 = vector.extract_strided_slice %25 {offsets = [0, 0, 96], sizes = [8, 8, 32], strides = [1, 1, 1]} : vector<8x8x128xbf16> to vector<8x8x32xbf16>
    %104 = vector.extract_strided_slice %26 {offsets = [0, 0, 96], sizes = [8, 8, 32], strides = [1, 1, 1]} : vector<8x8x128xbf16> to vector<8x8x32xbf16>
    "tpu.trace_start"() <{level = 10 : i32, message = "bsd,btd->bst"}> : () -> ()
    %cst_44 = arith.constant dense<0.000000e+00> : vector<8x8x8xf32>
    %105 = tpu.matmul %102, %103, %cst_44 {dimension_numbers = #tpu.dot_dimension_numbers<[2], [2], [1], [1], [0, 0, 0, 1, 1, 1], [0], [0]>} : vector<8x8x32xbf16>, vector<8x8x32xbf16>, vector<8x8x8xf32> -> vector<8x8x8xf32>
    "tpu.trace_stop"() : () -> ()
    %106 = vector.broadcast %28 : vector<1x8x8xf32> to vector<8x8x8xf32>
    %107 = arith.addf %105, %106 : vector<8x8x8xf32>
    %cst_45 = arith.constant dense<0xFF800000> : vector<8x8xf32>
    %108 = vector.multi_reduction <maximumf>, %107, %cst_45 [2] : vector<8x8x8xf32> to vector<8x8xf32>
    %109 = vector.shape_cast %108 : vector<8x8xf32> to vector<8x8x1xf32>
    %110 = vector.broadcast %109 : vector<8x8x1xf32> to vector<8x8x8xf32>
    %111 = arith.subf %107, %110 : vector<8x8x8xf32>
    %112 = math.exp %111 : vector<8x8x8xf32>
    %cst_46 = arith.constant dense<0.000000e+00> : vector<8x8xf32>
    %113 = vector.multi_reduction <add>, %112, %cst_46 [2] : vector<8x8x8xf32> to vector<8x8xf32>
    %114 = vector.shape_cast %113 : vector<8x8xf32> to vector<8x8x1xf32>
    %115 = tpu.reciprocal %114 {approx = true} : vector<8x8x1xf32> -> vector<8x8x1xf32>
    %116 = vector.broadcast %115 : vector<8x8x1xf32> to vector<8x8x8xf32>
    %117 = arith.mulf %112, %116 : vector<8x8x8xf32>
    %118 = arith.truncf %117 : vector<8x8x8xf32> to vector<8x8x8xbf16>
    "tpu.trace_start"() <{level = 10 : i32, message = "bst,btd->bsd"}> : () -> ()
    %cst_47 = arith.constant dense<0.000000e+00> : vector<8x8x32xf32>
    %119 = tpu.matmul %118, %104, %cst_47 {dimension_numbers = #tpu.dot_dimension_numbers<[2], [1], [1], [2], [0, 0, 0, 1, 1, 2], [0], [0]>} : vector<8x8x8xbf16>, vector<8x8x32xbf16>, vector<8x8x32xf32> -> vector<8x8x32xf32>
    "tpu.trace_stop"() : () -> ()
    %120 = vector.shape_cast %119 : vector<8x8x32xf32> to vector<64x32xf32>
    %121 = arith.truncf %120 : vector<64x32xf32> to vector<64x32xbf16>
    %c3 = arith.constant 3 : index
    %c0_48 = arith.constant 0 : index
    %c0_49 = arith.constant 0 : index
    %122 = vector.load %arg8[%c3, %c0_48, %c0_49] : memref<4x32x128xbf16, #tpu.memory_space<vmem>>, vector<1x32x128xbf16>
    %123 = vector.shape_cast %122 : vector<1x32x128xbf16> to vector<32x128xbf16>
    %cst_50 = arith.constant dense<0.000000e+00> : vector<64x128xf32>
    %124 = tpu.matmul %121, %123, %cst_50 {dimension_numbers = #tpu.dot_dimension_numbers<[1], [0], [0], [1], [0, 0, 1, 1], [], []>} : vector<64x32xbf16>, vector<32x128xbf16>, vector<64x128xf32> -> vector<64x128xf32>
    %125 = arith.addf %101, %124 : vector<64x128xf32>
    %c0_51 = arith.constant 0 : index
    %c0_52 = arith.constant 0 : index
    %126 = vector.load %arg12[%c0_51, %c0_52] : memref<1x128xf32, #tpu.memory_space<vmem>>, vector<1x128xf32>
    %127 = vector.broadcast %126 : vector<1x128xf32> to vector<64x128xf32>
    %128 = arith.addf %125, %127 : vector<64x128xf32>
    %c0_53 = arith.constant 0 : index
    %c0_54 = arith.constant 0 : index
    %129 = vector.load %arg13[%c0_53, %c0_54] : memref<64x128xf32, #tpu.memory_space<vmem>>, vector<64x128xf32>
    tpu.vector_store %arg13[%c0_53, %c0_54], %128 {strides = array<i32>} : memref<64x128xf32, #tpu.memory_space<vmem>>, vector<64x128xf32>,
    return
  }
  func.func @transform_0(%arg0: i32) -> (i32, i32) {
    %c0_i32 = arith.constant 0 : i32
    %c0_i32_0 = arith.constant 0 : i32
    return %arg0, %c0_i32 : i32, i32
  }
  func.func @transform_1(%arg0: i32) -> (i32, i32) {
    %c0_i32 = arith.constant 0 : i32
    %c0_i32_0 = arith.constant 0 : i32
    return %arg0, %c0_i32 : i32, i32
  }
  func.func @transform_2(%arg0: i32) -> (i32, i32) {
    %c0_i32 = arith.constant 0 : i32
    %c0_i32_0 = arith.constant 0 : i32
    return %arg0, %c0_i32 : i32, i32
  }
  func.func @transform_3(%arg0: i32) -> (i32, i32) {
    %c0_i32 = arith.constant 0 : i32
    %c0_i32_0 = arith.constant 0 : i32
    %c0_i32_1 = arith.constant 0 : i32
    return %c0_i32, %c0_i32_0 : i32, i32
  }
  func.func @transform_4(%arg0: i32) -> (i32, i32) {
    %c0_i32 = arith.constant 0 : i32
    %c0_i32_0 = arith.constant 0 : i32
    %c0_i32_1 = arith.constant 0 : i32
    return %c0_i32, %c0_i32_0 : i32, i32
  }
  func.func @transform_5(%arg0: i32) -> (i32, i32) {
    %c0_i32 = arith.constant 0 : i32
    %c0_i32_0 = arith.constant 0 : i32
    %c0_i32_1 = arith.constant 0 : i32
    return %c0_i32, %c0_i32_0 : i32, i32
  }
  func.func @transform_6(%arg0: i32) -> (i32, i32) {
    %c0_i32 = arith.constant 0 : i32
    %c0_i32_0 = arith.constant 0 : i32
    %c0_i32_1 = arith.constant 0 : i32
    return %c0_i32, %c0_i32_0 : i32, i32
  }
  func.func @transform_7(%arg0: i32) -> (i32, i32, i32) {
    %c0_i32 = arith.constant 0 : i32
    %c0_i32_0 = arith.constant 0 : i32
    %c0_i32_1 = arith.constant 0 : i32
    %c0_i32_2 = arith.constant 0 : i32
    return %c0_i32, %c0_i32_0, %c0_i32_1 : i32, i32, i32
  }
  func.func @transform_8(%arg0: i32) -> (i32, i32) {
    %c0_i32 = arith.constant 0 : i32
    %c0_i32_0 = arith.constant 0 : i32
    %c0_i32_1 = arith.constant 0 : i32
    return %c0_i32, %c0_i32_0 : i32, i32
  }
  func.func @transform_9(%arg0: i32) -> (i32, i32) {
    %c0_i32 = arith.constant 0 : i32
    %c0_i32_0 = arith.constant 0 : i32
    %c0_i32_1 = arith.constant 0 : i32
    return %c0_i32, %c0_i32_0 : i32, i32
  }
  func.func @transform_10(%arg0: i32) -> (i32, i32) {
    %c0_i32 = arith.constant 0 : i32
    %c0_i32_0 = arith.constant 0 : i32
    %c0_i32_1 = arith.constant 0 : i32
    return %c0_i32, %c0_i32_0 : i32, i32
  }
  func.func @transform_11(%arg0: i32) -> (i32, i32) {
    %c0_i32 = arith.constant 0 : i32
    %c0_i32_0 = arith.constant 0 : i32
    %c0_i32_1 = arith.constant 0 : i32
    return %c0_i32, %c0_i32_0 : i32, i32
  }
  func.func @transform_12(%arg0: i32) -> (i32, i32) {
    %c0_i32 = arith.constant 0 : i32
    %c0_i32_0 = arith.constant 0 : i32
    return %arg0, %c0_i32 : i32, i32
  }
}

</mosaic_0001>

<llo_original>
// kernel: multi_head_attention.1
$region0: #{multi_head_attention.1}
  #allocation0 [shape = 'u32[]', space=smem, size = 0x4, offset = 0x4, fixed_abs, tag = 'smem constant byte address 0x4 - core index']
  #allocation1 [shape = 'u32[72,128]{1,0:T(1,128)}', space=vmem, size = 0x9000, scoped, tag = 'internal scratch']
  %s0 = inlined_call_operand.vmem [shape: f32[64,128], index: 0, kind: input, shape index: {}]
  %s1 = inlined_call_operand.vmem [shape: f32[64,128], index: 1, kind: input, shape index: {}]
  %s2 = inlined_call_operand.vmem [shape: f32[64,128], index: 2, kind: input, shape index: {}]
  %s3 = inlined_call_operand.vmem [shape: f32[8,8], index: 3, kind: input, shape index: {}]
  %s4 = inlined_call_operand.vmem [shape: bf16[128,128], index: 4, kind: input, shape index: {}]
  %s5 = inlined_call_operand.vmem [shape: bf16[128,128], index: 5, kind: input, shape index: {}]
  %s6 = inlined_call_operand.vmem [shape: bf16[128,128], index: 6, kind: input, shape index: {}]
  %s7 = inlined_call_operand.vmem [shape: bf16[4,32,128], index: 7, kind: input, shape index: {}]
  %s8 = inlined_call_operand.vmem [shape: f32[1,128], index: 8, kind: input, shape index: {}]
  %s9 = inlined_call_operand.vmem [shape: f32[1,128], index: 9, kind: input, shape index: {}]
  %s10 = inlined_call_operand.vmem [shape: f32[1,128], index: 10, kind: input, shape index: {}]
  %s11 = inlined_call_operand.vmem [shape: f32[1,128], index: 11, kind: input, shape index: {}]
  %s12 = inlined_call_operand.hbm [shape: f32[64,128], index: 12, kind: output, shape index: {}]
  %s13 = sld [smem:[#allocation0]]
  $region58: #{multi_head_attention.1} parent=0
    _
  %s15 = ssub.s32 1, %s13
  %s16 = scalar_select 0, %s15, %s13
  $region1: #{multi_head_attention.1} parent=0
    #allocation2 [shape = 'u8[32768]{0}', space=vmem, size = 0x8000, scoped, tag = 'output window, operand 0, single buffered']
    #allocation3 [shape = 's32[1]{0}', space=sflag, size = 0x4, scoped, tag = 'scoped memory for multi_head_attention.1']
    %17 = vsyncpa [#allocation3], 0
    // Predicated region
    $region2: #{multi_head_attention.1} parent=1 // pred_check
      _
    $region3: #{multi_head_attention.1} parent=1 // pred_check_branch
      %19 = sbr.rel (0) target = $region5
    $region4: #{multi_head_attention.1} parent=1 // pred_region
      _
    $region5: #{multi_head_attention.1} parent=1 // pred_fallthru
      _
    // Predicated region
    $region6: #{multi_head_attention.1} parent=1 // pred_check
      _
    $region7: #{multi_head_attention.1} parent=1 // pred_check_branch
      %21 = sbr.rel (0) target = $region9
    $region8: #{multi_head_attention.1} parent=1 // pred_region
      _
    $region9: #{multi_head_attention.1} parent=1 // pred_fallthru
      _
    // Predicated region
    $region10: #{multi_head_attention.1} parent=1 // pred_check
      _
    $region11: #{multi_head_attention.1} parent=1 // pred_check_branch
      %23 = sbr.rel (0) target = $region13
    $region12: #{multi_head_attention.1} parent=1 // pred_region
      _
    $region13: #{multi_head_attention.1} parent=1 // pred_fallthru
      _
    // Predicated region
    $region14: #{multi_head_attention.1} parent=1 // pred_check
      _
    $region15: #{multi_head_attention.1} parent=1 // pred_check_branch
      %25 = sbr.rel (0) target = $region17
    $region16: #{multi_head_attention.1} parent=1 // pred_region
      _
    $region17: #{multi_head_attention.1} parent=1 // pred_fallthru
      _
    // Predicated region
    $region18: #{multi_head_attention.1} parent=1 // pred_check
      _
    $region19: #{multi_head_attention.1} parent=1 // pred_check_branch
      %27 = sbr.rel (0) target = $region21
    $region20: #{multi_head_attention.1} parent=1 // pred_region
      _
    $region21: #{multi_head_attention.1} parent=1 // pred_fallthru
      _
    // Predicated region
    $region22: #{multi_head_attention.1} parent=1 // pred_check
      _
    $region23: #{multi_head_attention.1} parent=1 // pred_check_branch
      %29 = sbr.rel (0) target = $region25
    $region24: #{multi_head_attention.1} parent=1 // pred_region
      _
    $region25: #{multi_head_attention.1} parent=1 // pred_fallthru
      _
    // Predicated region
    $region26: #{multi_head_attention.1} parent=1 // pred_check
      _
    $region27: #{multi_head_attention.1} parent=1 // pred_check_branch
      %31 = sbr.rel (0) target = $region29
    $region28: #{multi_head_attention.1} parent=1 // pred_region
      _
    $region29: #{multi_head_attention.1} parent=1 // pred_fallthru
      _
    // Predicated region
    $region30: #{multi_head_attention.1} parent=1 // pred_check
      _
    $region31: #{multi_head_attention.1} parent=1 // pred_check_branch
      %33 = sbr.rel (0) target = $region33
    $region32: #{multi_head_attention.1} parent=1 // pred_region
      _
    $region33: #{multi_head_attention.1} parent=1 // pred_fallthru
      _
    // Predicated region
    $region34: #{multi_head_attention.1} parent=1 // pred_check
      _
    $region35: #{multi_head_attention.1} parent=1 // pred_check_branch
      %35 = sbr.rel (0) target = $region37
    $region36: #{multi_head_attention.1} parent=1 // pred_region
      _
    $region37: #{multi_head_attention.1} parent=1 // pred_fallthru
      _
    // Predicated region
    $region38: #{multi_head_attention.1} parent=1 // pred_check
      _
    $region39: #{multi_head_attention.1} parent=1 // pred_check_branch
      %37 = sbr.rel (0) target = $region41
    $region40: #{multi_head_attention.1} parent=1 // pred_region
      _
    $region41: #{multi_head_attention.1} parent=1 // pred_fallthru
      _
    // Predicated region
    $region42: #{multi_head_attention.1} parent=1 // pred_check
      _
    $region43: #{multi_head_attention.1} parent=1 // pred_check_branch
      %39 = sbr.rel (0) target = $region45
    $region44: #{multi_head_attention.1} parent=1 // pred_region
      _
    $region45: #{multi_head_attention.1} parent=1 // pred_fallthru
      _
    // Predicated region
    $region46: #{multi_head_attention.1} parent=1 // pred_check
      _
    $region47: #{multi_head_attention.1} parent=1 // pred_check_branch
      %41 = sbr.rel (0) target = $region49
    $region48: #{multi_head_attention.1} parent=1 // pred_region
      _
    $region49: #{multi_head_attention.1} parent=1 // pred_fallthru
      _
    %v43 = vld [vmem:[%s0] sm:$0xff]
    %v44 = vld [vmem:[%s0 + $0x8] sm:$0xff]
    %v45 = vld [vmem:[%s0 + $0x10] sm:$0xff]
    %v46 = vld [vmem:[%s0 + $0x18] sm:$0xff]
    %v47 = vld [vmem:[%s0 + $0x20] sm:$0xff]
    %v48 = vld [vmem:[%s0 + $0x28] sm:$0xff]
    %v49 = vld [vmem:[%s0 + $0x30] sm:$0xff]
    %v50 = vld [vmem:[%s0 + $0x38] sm:$0xff]
    %v51 = vpack.c.bf16 %v44, %v43
    %v52 = vpack.c.bf16 %v46, %v45
    %v53 = vpack.c.bf16 %v48, %v47
    %v54 = vpack.c.bf16 %v50, %v49
    %v55 = vld [vmem:[%s4] sm:$0xf]
    %v56 = vld [vmem:[%s4 + $0x4] sm:$0xf]
    %v57 = vld [vmem:[%s4 + $0x8] sm:$0xf]
    %v58 = vld [vmem:[%s4 + $0xc] sm:$0xf]
    %v59 = vld [vmem:[%s4 + $0x10] sm:$0xf]
    %v60 = vld [vmem:[%s4 + $0x14] sm:$0xf]
    %v61 = vld [vmem:[%s4 + $0x18] sm:$0xf]
    %v62 = vld [vmem:[%s4 + $0x1c] sm:$0xf]
    %v63 = vld [vmem:[%s4 + $0x20] sm:$0xf]
    %v64 = vld [vmem:[%s4 + $0x24] sm:$0xf]
    %v65 = vld [vmem:[%s4 + $0x28] sm:$0xf]
    %v66 = vld [vmem:[%s4 + $0x2c] sm:$0xf]
    %v67 = vld [vmem:[%s4 + $0x30] sm:$0xf]
    %v68 = vld [vmem:[%s4 + $0x34] sm:$0xf]
    %v69 = vld [vmem:[%s4 + $0x38] sm:$0xf]
    %v70 = vld [vmem:[%s4 + $0x3c] sm:$0xf]
    %v71 = vld [vmem:[%s8] sm:$0x1]
    %v73 = vperm.slane %v71, 0
    %v91 = vunpack.c.l.b16 %v55
    %v92 = vunpack.c.l.b16 %v56
    %v93 = vunpack.c.l.b16 %v57
    %v94 = vunpack.c.l.b16 %v58
    %v95 = vunpack.c.l.b16 %v59
    %v96 = vunpack.c.l.b16 %v60
    %v97 = vunpack.c.l.b16 %v61
    %v98 = vunpack.c.l.b16 %v62
    %v99 = vunpack.c.l.b16 %v63
    %v100 = vunpack.c.l.b16 %v64
    %v101 = vunpack.c.l.b16 %v65
    %v102 = vunpack.c.l.b16 %v66
    %v103 = vunpack.c.l.b16 %v67
    %v104 = vunpack.c.l.b16 %v68
    %v105 = vunpack.c.l.b16 %v69
    %v106 = vunpack.c.l.b16 %v70
    %v107 = vpack.c.b16 %v92, %v91
    %v108 = vpack.c.b16 %v94, %v93
    %v109 = vpack.c.b16 %v96, %v95
    %v110 = vpack.c.b16 %v98, %v97
    %v111 = vpack.c.b16 %v100, %v99
    %v112 = vpack.c.b16 %v102, %v101
    %v113 = vpack.c.b16 %v104, %v103
    %v114 = vpack.c.b16 %v106, %v105
    %123 = vmatpush.bf16.msra.mxu0 %v114
    %124 = vmatpush.bf16.msra.mxu0 %v113
    %125 = vmatpush.bf16.msra.mxu0 %v112
    %126 = vmatpush.bf16.msra.mxu0 %v111
    %127 = vmatpush.bf16.msra.mxu0 %v110
    %128 = vmatpush.bf16.msra.mxu0 %v109
    %129 = vmatpush.bf16.msra.mxu0 %v108
    %130 = vmatpush.bf16.msra.mxu0 %v107
    %131 = vmatmul.bf16.gmra.mxu0 %v51
    %v132 = vpop.f32.mrf.mxu0
    %v133 = vadd.f32 %v73, %v132
    %v134 = vpop.f32.mrf.mxu0
    %v135 = vadd.f32 %v73, %v134
    %136 = vmatmul.bf16.gmra.mxu0 %v52
    %v137 = vpop.f32.mrf.mxu0
    %v138 = vadd.f32 %v73, %v137
    %v139 = vpop.f32.mrf.mxu0
    %v140 = vadd.f32 %v73, %v139
    %141 = vmatmul.bf16.gmra.mxu0 %v53
    %v142 = vpop.f32.mrf.mxu0
    %v143 = vadd.f32 %v73, %v142
    %v144 = vpop.f32.mrf.mxu0
    %v145 = vadd.f32 %v73, %v144
    %146 = vmatmul.bf16.gmra.mxu0 %v54
    %v147 = vpop.f32.mrf.mxu0
    %v148 = vadd.f32 %v73, %v147
    %v149 = vpop.f32.mrf.mxu0
    %v150 = vadd.f32 %v73, %v149
    %151 = vdwg.mxu0
    %v152 = vpack.c.bf16 %v133, %v133
    %v153 = vpack.c.bf16 %v135, %v135
    %v154 = vpack.c.bf16 %v138, %v138
    %v155 = vpack.c.bf16 %v140, %v140
    %v156 = vpack.c.bf16 %v143, %v143
    %v157 = vpack.c.bf16 %v145, %v145
    %v158 = vpack.c.bf16 %v148, %v148
    %v159 = vpack.c.bf16 %v150, %v150
    %v160 = vld [vmem:[%s1] sm:$0xff]
    %v161 = vld [vmem:[%s1 + $0x8] sm:$0xff]
    %v162 = vld [vmem:[%s1 + $0x10] sm:$0xff]
    %v163 = vld [vmem:[%s1 + $0x18] sm:$0xff]
    %v164 = vld [vmem:[%s1 + $0x20] sm:$0xff]
    %v165 = vld [vmem:[%s1 + $0x28] sm:$0xff]
    %v166 = vld [vmem:[%s1 + $0x30] sm:$0xff]
    %v167 = vld [vmem:[%s1 + $0x38] sm:$0xff]
    %v168 = vpack.c.bf16 %v161, %v160
    %v169 = vpack.c.bf16 %v163, %v162
    %v170 = vpack.c.bf16 %v165, %v164
    %v171 = vpack.c.bf16 %v167, %v166
    %v172 = vld [vmem:[%s5] sm:$0xf]
    %v173 = vld [vmem:[%s5 + $0x4] sm:$0xf]
    %v174 = vld [vmem:[%s5 + $0x8] sm:$0xf]
    %v175 = vld [vmem:[%s5 + $0xc] sm:$0xf]
    %v176 = vld [vmem:[%s5 + $0x10] sm:$0xf]
    %v177 = vld [vmem:[%s5 + $0x14] sm:$0xf]
    %v178 = vld [vmem:[%s5 + $0x18] sm:$0xf]
    %v179 = vld [vmem:[%s5 + $0x1c] sm:$0xf]
    %v180 = vld [vmem:[%s5 + $0x20] sm:$0xf]
    %v181 = vld [vmem:[%s5 + $0x24] sm:$0xf]
    %v182 = vld [vmem:[%s5 + $0x28] sm:$0xf]
    %v183 = vld [vmem:[%s5 + $0x2c] sm:$0xf]
    %v184 = vld [vmem:[%s5 + $0x30] sm:$0xf]
    %v185 = vld [vmem:[%s5 + $0x34] sm:$0xf]
    %v186 = vld [vmem:[%s5 + $0x38] sm:$0xf]
    %v187 = vld [vmem:[%s5 + $0x3c] sm:$0xf]
    %v188 = vld [vmem:[%s9] sm:$0x1]
    %v190 = vperm.slane %v188, 0
    %v208 = vunpack.c.l.b16 %v172
    %v209 = vunpack.c.l.b16 %v173
    %v210 = vunpack.c.l.b16 %v174
    %v211 = vunpack.c.l.b16 %v175
    %v212 = vunpack.c.l.b16 %v176
    %v213 = vunpack.c.l.b16 %v177
    %v214 = vunpack.c.l.b16 %v178
    %v215 = vunpack.c.l.b16 %v179
    %v216 = vunpack.c.l.b16 %v180
    %v217 = vunpack.c.l.b16 %v181
    %v218 = vunpack.c.l.b16 %v182
    %v219 = vunpack.c.l.b16 %v183
    %v220 = vunpack.c.l.b16 %v184
    %v221 = vunpack.c.l.b16 %v185
    %v222 = vunpack.c.l.b16 %v186
    %v223 = vunpack.c.l.b16 %v187
    %v224 = vpack.c.b16 %v209, %v208
    %v225 = vpack.c.b16 %v211, %v210
    %v226 = vpack.c.b16 %v213, %v212
    %v227 = vpack.c.b16 %v215, %v214
    %v228 = vpack.c.b16 %v217, %v216
    %v229 = vpack.c.b16 %v219, %v218
    %v230 = vpack.c.b16 %v221, %v220
    %v231 = vpack.c.b16 %v223, %v222
    %240 = vmatpush.bf16.msra.mxu0 %v231
    %241 = vmatpush.bf16.msra.mxu0 %v230
    %242 = vmatpush.bf16.msra.mxu0 %v229
    %243 = vmatpush.bf16.msra.mxu0 %v228
    %244 = vmatpush.bf16.msra.mxu0 %v227
    %245 = vmatpush.bf16.msra.mxu0 %v226
    %246 = vmatpush.bf16.msra.mxu0 %v225
    %247 = vmatpush.bf16.msra.mxu0 %v224
    %248 = vmatmul.bf16.gmra.mxu0 %v168
    %v249 = vpop.f32.mrf.mxu0
    %v250 = vadd.f32 %v190, %v249
    %v251 = vpop.f32.mrf.mxu0
    %v252 = vadd.f32 %v190, %v251
    %253 = vmatmul.bf16.gmra.mxu0 %v169
    %v254 = vpop.f32.mrf.mxu0
    %v255 = vadd.f32 %v190, %v254
    %v256 = vpop.f32.mrf.mxu0
    %v257 = vadd.f32 %v190, %v256
    %258 = vmatmul.bf16.gmra.mxu0 %v170
    %v259 = vpop.f32.mrf.mxu0
    %v260 = vadd.f32 %v190, %v259
    %v261 = vpop.f32.mrf.mxu0
    %v262 = vadd.f32 %v190, %v261
    %263 = vmatmul.bf16.gmra.mxu0 %v171
    %v264 = vpop.f32.mrf.mxu0
    %v265 = vadd.f32 %v190, %v264
    %v266 = vpop.f32.mrf.mxu0
    %v267 = vadd.f32 %v190, %v266
    %268 = vdwg.mxu0
    %v269 = vpack.c.bf16 %v250, %v250
    %v270 = vpack.c.bf16 %v252, %v252
    %v271 = vpack.c.bf16 %v255, %v255
    %v272 = vpack.c.bf16 %v257, %v257
    %v273 = vpack.c.bf16 %v260, %v260
    %v274 = vpack.c.bf16 %v262, %v262
    %v275 = vpack.c.bf16 %v265, %v265
    %v276 = vpack.c.bf16 %v267, %v267
    %v277 = vld [vmem:[%s2] sm:$0xff]
    %v278 = vld [vmem:[%s2 + $0x8] sm:$0xff]
    %v279 = vld [vmem:[%s2 + $0x10] sm:$0xff]
    %v280 = vld [vmem:[%s2 + $0x18] sm:$0xff]
    %v281 = vld [vmem:[%s2 + $0x20] sm:$0xff]
    %v282 = vld [vmem:[%s2 + $0x28] sm:$0xff]
    %v283 = vld [vmem:[%s2 + $0x30] sm:$0xff]
    %v284 = vld [vmem:[%s2 + $0x38] sm:$0xff]
    %v285 = vpack.c.bf16 %v278, %v277
    %v286 = vpack.c.bf16 %v280, %v279
    %v287 = vpack.c.bf16 %v282, %v281
    %v288 = vpack.c.bf16 %v284, %v283
    %v289 = vld [vmem:[%s6] sm:$0xf]
    %v290 = vld [vmem:[%s6 + $0x4] sm:$0xf]
    %v291 = vld [vmem:[%s6 + $0x8] sm:$0xf]
    %v292 = vld [vmem:[%s6 + $0xc] sm:$0xf]
    %v293 = vld [vmem:[%s6 + $0x10] sm:$0xf]
    %v294 = vld [vmem:[%s6 + $0x14] sm:$0xf]
    %v295 = vld [vmem:[%s6 + $0x18] sm:$0xf]
    %v296 = vld [vmem:[%s6 + $0x1c] sm:$0xf]
    %v297 = vld [vmem:[%s6 + $0x20] sm:$0xf]
    %v298 = vld [vmem:[%s6 + $0x24] sm:$0xf]
    %v299 = vld [vmem:[%s6 + $0x28] sm:$0xf]
    %v300 = vld [vmem:[%s6 + $0x2c] sm:$0xf]
    %v301 = vld [vmem:[%s6 + $0x30] sm:$0xf]
    %v302 = vld [vmem:[%s6 + $0x34] sm:$0xf]
    %v303 = vld [vmem:[%s6 + $0x38] sm:$0xf]
    %v304 = vld [vmem:[%s6 + $0x3c] sm:$0xf]
    %v305 = vld [vmem:[%s10] sm:$0x1]
    %v307 = vperm.slane %v305, 0
    %v325 = vunpack.c.l.b16 %v289
    %v326 = vunpack.c.l.b16 %v290
    %v327 = vunpack.c.l.b16 %v291
    %v328 = vunpack.c.l.b16 %v292
    %v329 = vunpack.c.l.b16 %v293
    %v330 = vunpack.c.l.b16 %v294
    %v331 = vunpack.c.l.b16 %v295
    %v332 = vunpack.c.l.b16 %v296
    %v333 = vunpack.c.l.b16 %v297
    %v334 = vunpack.c.l.b16 %v298
    %v335 = vunpack.c.l.b16 %v299
    %v336 = vunpack.c.l.b16 %v300
    %v337 = vunpack.c.l.b16 %v301
    %v338 = vunpack.c.l.b16 %v302
    %v339 = vunpack.c.l.b16 %v303
    %v340 = vunpack.c.l.b16 %v304
    %v341 = vpack.c.b16 %v326, %v325
    %v342 = vpack.c.b16 %v328, %v327
    %v343 = vpack.c.b16 %v330, %v329
    %v344 = vpack.c.b16 %v332, %v331
    %v345 = vpack.c.b16 %v334, %v333
    %v346 = vpack.c.b16 %v336, %v335
    %v347 = vpack.c.b16 %v338, %v337
    %v348 = vpack.c.b16 %v340, %v339
    %357 = vmatpush.bf16.msra.mxu0 %v348
    %358 = vmatpush.bf16.msra.mxu0 %v347
    %359 = vmatpush.bf16.msra.mxu0 %v346
    %360 = vmatpush.bf16.msra.mxu0 %v345
    %361 = vmatpush.bf16.msra.mxu0 %v344
    %362 = vmatpush.bf16.msra.mxu0 %v343
    %363 = vmatpush.bf16.msra.mxu0 %v342
    %364 = vmatpush.bf16.msra.mxu0 %v341
    %365 = vmatmul.bf16.gmra.mxu0 %v285
    %v366 = vpop.f32.mrf.mxu0
    %v367 = vadd.f32 %v307, %v366
    %v368 = vpop.f32.mrf.mxu0
    %v369 = vadd.f32 %v307, %v368
    %370 = vmatmul.bf16.gmra.mxu0 %v286
    %v371 = vpop.f32.mrf.mxu0
    %v372 = vadd.f32 %v307, %v371
    %v373 = vpop.f32.mrf.mxu0
    %v374 = vadd.f32 %v307, %v373
    %375 = vmatmul.bf16.gmra.mxu0 %v287
    %v376 = vpop.f32.mrf.mxu0
    %v377 = vadd.f32 %v307, %v376
    %v378 = vpop.f32.mrf.mxu0
    %v379 = vadd.f32 %v307, %v378
    %380 = vmatmul.bf16.gmra.mxu0 %v288
    %v381 = vpop.f32.mrf.mxu0
    %v382 = vadd.f32 %v307, %v381
    %v383 = vpop.f32.mrf.mxu0
    %v384 = vadd.f32 %v307, %v383
    %385 = vdwg.mxu0
    %v386 = vpack.c.bf16 %v367, %v367
    %v387 = vpack.c.bf16 %v369, %v369
    %v388 = vpack.c.bf16 %v372, %v372
    %v389 = vpack.c.bf16 %v374, %v374
    %v390 = vpack.c.bf16 %v377, %v377
    %v391 = vpack.c.bf16 %v379, %v379
    %v392 = vpack.c.bf16 %v382, %v382
    %v393 = vpack.c.bf16 %v384, %v384
    %v394 = vld [vmem:[%s3] sm:$0xff]
    %vm395 = vcmask 261120
    %v397 = vsel %vm395, %v152, 0
    %v400 = vsel %vm395, %v269, 0
    %402 = vmatpush.bf16.xpose.msra.mxu0 0
    %403 = vmatpush.bf16.xpose.msra.mxu0 0
    %404 = vmatpush.bf16.xpose.msra.mxu0 0
    %405 = vmatpush.bf16.xpose.msra.mxu0 0
    %406 = vmatpush.bf16.xpose.msra.mxu0 0
    %407 = vmatpush.bf16.xpose.msra.mxu0 0
    %408 = vmatpush.bf16.xpose.msra.mxu0 0
    %409 = vmatpush.bf16.xpose.msra.mxu0 %v400
    %410 = vmatmul.bf16.gmra.mxu0 %v397
    %v411 = vpop.f32.mrf.mxu0
    %v412 = vadd.f32 %v394, %v411
    %v413 = vpop.f32.mrf.mxu0
    %414 = vdwg.mxu0
    %v416 = vsel %vm395, %v153, 0
    %v419 = vsel %vm395, %v270, 0
    %421 = vmatpush.bf16.xpose.msra.mxu0 0
    %422 = vmatpush.bf16.xpose.msra.mxu0 0
    %423 = vmatpush.bf16.xpose.msra.mxu0 0
    %424 = vmatpush.bf16.xpose.msra.mxu0 0
    %425 = vmatpush.bf16.xpose.msra.mxu0 0
    %426 = vmatpush.bf16.xpose.msra.mxu0 0
    %427 = vmatpush.bf16.xpose.msra.mxu0 0
    %428 = vmatpush.bf16.xpose.msra.mxu0 %v419
    %429 = vmatmul.bf16.gmra.mxu0 %v416
    %v430 = vpop.f32.mrf.mxu0
    %v431 = vadd.f32 %v394, %v430
    %v432 = vpop.f32.mrf.mxu0
    %433 = vdwg.mxu0
    %v435 = vsel %vm395, %v154, 0
    %v438 = vsel %vm395, %v271, 0
    %440 = vmatpush.bf16.xpose.msra.mxu0 0
    %441 = vmatpush.bf16.xpose.msra.mxu0 0
    %442 = vmatpush.bf16.xpose.msra.mxu0 0
    %443 = vmatpush.bf16.xpose.msra.mxu0 0
    %444 = vmatpush.bf16.xpose.msra.mxu0 0
    %445 = vmatpush.bf16.xpose.msra.mxu0 0
    %446 = vmatpush.bf16.xpose.msra.mxu0 0
    %447 = vmatpush.bf16.xpose.msra.mxu0 %v438
    %448 = vmatmul.bf16.gmra.mxu0 %v435
    %v449 = vpop.f32.mrf.mxu0
    %v450 = vadd.f32 %v394, %v449
    %v451 = vpop.f32.mrf.mxu0
    %452 = vdwg.mxu0
    %v454 = vsel %vm395, %v155, 0
    %v457 = vsel %vm395, %v272, 0
    %459 = vmatpush.bf16.xpose.msra.mxu0 0
    %460 = vmatpush.bf16.xpose.msra.mxu0 0
    %461 = vmatpush.bf16.xpose.msra.mxu0 0
    %462 = vmatpush.bf16.xpose.msra.mxu0 0
    %463 = vmatpush.bf16.xpose.msra.mxu0 0
    %464 = vmatpush.bf16.xpose.msra.mxu0 0
    %465 = vmatpush.bf16.xpose.msra.mxu0 0
    %466 = vmatpush.bf16.xpose.msra.mxu0 %v457
    %467 = vmatmul.bf16.gmra.mxu0 %v454
    %v468 = vpop.f32.mrf.mxu0
    %v469 = vadd.f32 %v394, %v468
    %v470 = vpop.f32.mrf.mxu0
    %471 = vdwg.mxu0
    %v473 = vsel %vm395, %v156, 0
    %v476 = vsel %vm395, %v273, 0
    %478 = vmatpush.bf16.xpose.msra.mxu0 0
    %479 = vmatpush.bf16.xpose.msra.mxu0 0
    %480 = vmatpush.bf16.xpose.msra.mxu0 0
    %481 = vmatpush.bf16.xpose.msra.mxu0 0
    %482 = vmatpush.bf16.xpose.msra.mxu0 0
    %483 = vmatpush.bf16.xpose.msra.mxu0 0
    %484 = vmatpush.bf16.xpose.msra.mxu0 0
    %485 = vmatpush.bf16.xpose.msra.mxu0 %v476
    %486 = vmatmul.bf16.gmra.mxu0 %v473
    %v487 = vpop.f32.mrf.mxu0
    %v488 = vadd.f32 %v394, %v487
    %v489 = vpop.f32.mrf.mxu0
    %490 = vdwg.mxu0
    %v492 = vsel %vm395, %v157, 0
    %v495 = vsel %vm395, %v274, 0
    %497 = vmatpush.bf16.xpose.msra.mxu0 0
    %498 = vmatpush.bf16.xpose.msra.mxu0 0
    %499 = vmatpush.bf16.xpose.msra.mxu0 0
    %500 = vmatpush.bf16.xpose.msra.mxu0 0
    %501 = vmatpush.bf16.xpose.msra.mxu0 0
    %502 = vmatpush.bf16.xpose.msra.mxu0 0
    %503 = vmatpush.bf16.xpose.msra.mxu0 0
    %504 = vmatpush.bf16.xpose.msra.mxu0 %v495
    %505 = vmatmul.bf16.gmra.mxu0 %v492
    %v506 = vpop.f32.mrf.mxu0
    %v507 = vadd.f32 %v394, %v506
    %v508 = vpop.f32.mrf.mxu0
    %509 = vdwg.mxu0
    %v511 = vsel %vm395, %v158, 0
    %v514 = vsel %vm395, %v275, 0
    %516 = vmatpush.bf16.xpose.msra.mxu0 0
    %517 = vmatpush.bf16.xpose.msra.mxu0 0
    %518 = vmatpush.bf16.xpose.msra.mxu0 0
    %519 = vmatpush.bf16.xpose.msra.mxu0 0
    %520 = vmatpush.bf16.xpose.msra.mxu0 0
    %521 = vmatpush.bf16.xpose.msra.mxu0 0
    %522 = vmatpush.bf16.xpose.msra.mxu0 0
    %523 = vmatpush.bf16.xpose.msra.mxu0 %v514
    %524 = vmatmul.bf16.gmra.mxu0 %v511
    %v525 = vpop.f32.mrf.mxu0
    %v526 = vadd.f32 %v394, %v525
    %v527 = vpop.f32.mrf.mxu0
    %528 = vdwg.mxu0
    %v530 = vsel %vm395, %v159, 0
    %v533 = vsel %vm395, %v276, 0
    %535 = vmatpush.bf16.xpose.msra.mxu0 0
    %536 = vmatpush.bf16.xpose.msra.mxu0 0
    %537 = vmatpush.bf16.xpose.msra.mxu0 0
    %538 = vmatpush.bf16.xpose.msra.mxu0 0
    %539 = vmatpush.bf16.xpose.msra.mxu0 0
    %540 = vmatpush.bf16.xpose.msra.mxu0 0
    %541 = vmatpush.bf16.xpose.msra.mxu0 0
    %542 = vmatpush.bf16.xpose.msra.mxu0 %v533
    %543 = vmatmul.bf16.gmra.mxu0 %v530
    %v544 = vpop.f32.mrf.mxu0
    %v545 = vadd.f32 %v394, %v544
    %v546 = vpop.f32.mrf.mxu0
    %547 = vdwg.mxu0
    %vm548 = vcmask 64512
    %v549 = vsel %vm548, %v412, -inf
    %550 = vmax.xlane.f32.xlu0 %v549
    %v551 = vpop.xlane.xlu0 %550
    %v552 = vsel %vm548, %v431, -inf
    %553 = vmax.xlane.f32.xlu0 %v552
    %v554 = vpop.xlane.xlu0 %553
    %v555 = vsel %vm548, %v450, -inf
    %556 = vmax.xlane.f32.xlu0 %v555
    %v557 = vpop.xlane.xlu0 %556
    %v558 = vsel %vm548, %v469, -inf
    %559 = vmax.xlane.f32.xlu0 %v558
    %v560 = vpop.xlane.xlu0 %559
    %v561 = vsel %vm548, %v488, -inf
    %562 = vmax.xlane.f32.xlu0 %v561
    %v563 = vpop.xlane.xlu0 %562
    %v564 = vsel %vm548, %v507, -inf
    %565 = vmax.xlane.f32.xlu0 %v564
    %v566 = vpop.xlane.xlu0 %565
    %v567 = vsel %vm548, %v526, -inf
    %568 = vmax.xlane.f32.xlu0 %v567
    %v569 = vpop.xlane.xlu0 %568
    %v570 = vsel %vm548, %v545, -inf
    %571 = vmax.xlane.f32.xlu0 %v570
    %v572 = vpop.xlane.xlu0 %571
    %v573 = vsub.f32 %v412, %v551
    %v574 = vsub.f32 %v431, %v554
    %v575 = vsub.f32 %v450, %v557
    %v576 = vsub.f32 %v469, %v560
    %v577 = vsub.f32 %v488, %v563
    %v578 = vsub.f32 %v507, %v566
    %v579 = vsub.f32 %v526, %v569
    %v580 = vsub.f32 %v545, %v572
    %v581 = vmul.f32 %v573, 1.442695
    %v582 = vpow.pop %v581
    %v583 = vmul.f32 %v574, 1.442695
    %v584 = vpow.pop %v583
    %v585 = vmul.f32 %v575, 1.442695
    %v586 = vpow.pop %v585
    %v587 = vmul.f32 %v576, 1.442695
    %v588 = vpow.pop %v587
    %v589 = vmul.f32 %v577, 1.442695
    %v590 = vpow.pop %v589
    %v591 = vmul.f32 %v578, 1.442695
    %v592 = vpow.pop %v591
    %v593 = vmul.f32 %v579, 1.442695
    %v594 = vpow.pop %v593
    %v595 = vmul.f32 %v580, 1.442695
    %v596 = vpow.pop %v595
    %v597 = vsel %vm548, %v582, 0.0
    %598 = vadd.xlane.f32.xlu0 %v597
    %v599 = vpop.xlane.xlu0 %598
    %v600 = vsel %vm548, %v584, 0.0
    %601 = vadd.xlane.f32.xlu0 %v600
    %v602 = vpop.xlane.xlu0 %601
    %v603 = vsel %vm548, %v586, 0.0
    %604 = vadd.xlane.f32.xlu0 %v603
    %v605 = vpop.xlane.xlu0 %604
    %v606 = vsel %vm548, %v588, 0.0
    %607 = vadd.xlane.f32.xlu0 %v606
    %v608 = vpop.xlane.xlu0 %607
    %v609 = vsel %vm548, %v590, 0.0
    %610 = vadd.xlane.f32.xlu0 %v609
    %v611 = vpop.xlane.xlu0 %610
    %v612 = vsel %vm548, %v592, 0.0
    %613 = vadd.xlane.f32.xlu0 %v612
    %v614 = vpop.xlane.xlu0 %613
    %v615 = vsel %vm548, %v594, 0.0
    %616 = vadd.xlane.f32.xlu0 %v615
    %v617 = vpop.xlane.xlu0 %616
    %v618 = vsel %vm548, %v596, 0.0
    %619 = vadd.xlane.f32.xlu0 %v618
    %v620 = vpop.xlane.xlu0 %619
    %v621 = vrcp.pop %v599
    %v622 = vrcp.pop %v602
    %v623 = vrcp.pop %v605
    %v624 = vrcp.pop %v608
    %v625 = vrcp.pop %v611
    %v626 = vrcp.pop %v614
    %v627 = vrcp.pop %v617
    %v628 = vrcp.pop %v620
    %v629 = vmul.f32 %v582, %v621
    %v630 = vmul.f32 %v584, %v622
    %v631 = vmul.f32 %v586, %v623
    %v632 = vmul.f32 %v588, %v624
    %v633 = vmul.f32 %v590, %v625
    %v634 = vmul.f32 %v592, %v626
    %v635 = vmul.f32 %v594, %v627
    %v636 = vmul.f32 %v596, %v628
    %v637 = vpack.c.bf16 %v629, %v629
    %v638 = vpack.c.bf16 %v630, %v630
    %v639 = vpack.c.bf16 %v631, %v631
    %v640 = vpack.c.bf16 %v632, %v632
    %v641 = vpack.c.bf16 %v633, %v633
    %v642 = vpack.c.bf16 %v634, %v634
    %v643 = vpack.c.bf16 %v635, %v635
    %v644 = vpack.c.bf16 %v636, %v636
    %v646 = vsel %vm548, %v637, 0
    %vm648 = vcmask 1043456
    %v650 = vsel %vm648, %v386, 0
    %652 = vmatpush.bf16.msra.mxu0 0
    %653 = vmatpush.bf16.msra.mxu0 0
    %654 = vmatpush.bf16.msra.mxu0 0
    %655 = vmatpush.bf16.msra.mxu0 0
    %656 = vmatpush.bf16.msra.mxu0 0
    %657 = vmatpush.bf16.msra.mxu0 0
    %658 = vmatpush.bf16.msra.mxu0 0
    %659 = vmatpush.bf16.msra.mxu0 %v650
    %660 = vmatmul.bf16.gmra.mxu0 %v646
    %v661 = vpop.f32.mrf.mxu0
    %v662 = vadd.f32 0.0, %v661
    %v663 = vpop.f32.mrf.mxu0
    %664 = vdwg.mxu0
    %v666 = vsel %vm548, %v638, 0
    %v669 = vsel %vm648, %v387, 0
    %671 = vmatpush.bf16.msra.mxu0 0
    %672 = vmatpush.bf16.msra.mxu0 0
    %673 = vmatpush.bf16.msra.mxu0 0
    %674 = vmatpush.bf16.msra.mxu0 0
    %675 = vmatpush.bf16.msra.mxu0 0
    %676 = vmatpush.bf16.msra.mxu0 0
    %677 = vmatpush.bf16.msra.mxu0 0
    %678 = vmatpush.bf16.msra.mxu0 %v669
    %679 = vmatmul.bf16.gmra.mxu0 %v666
    %v680 = vpop.f32.mrf.mxu0
    %v681 = vadd.f32 0.0, %v680
    %v682 = vpop.f32.mrf.mxu0
    %683 = vdwg.mxu0
    %v685 = vsel %vm548, %v639, 0
    %v688 = vsel %vm648, %v388, 0
    %690 = vmatpush.bf16.msra.mxu0 0
    %691 = vmatpush.bf16.msra.mxu0 0
    %692 = vmatpush.bf16.msra.mxu0 0
    %693 = vmatpush.bf16.msra.mxu0 0
    %694 = vmatpush.bf16.msra.mxu0 0
    %695 = vmatpush.bf16.msra.mxu0 0
    %696 = vmatpush.bf16.msra.mxu0 0
    %697 = vmatpush.bf16.msra.mxu0 %v688
    %698 = vmatmul.bf16.gmra.mxu0 %v685
    %v699 = vpop.f32.mrf.mxu0
    %v700 = vadd.f32 0.0, %v699
    %v701 = vpop.f32.mrf.mxu0
    %702 = vdwg.mxu0
    %v704 = vsel %vm548, %v640, 0
    %v707 = vsel %vm648, %v389, 0
    %709 = vmatpush.bf16.msra.mxu0 0
    %710 = vmatpush.bf16.msra.mxu0 0
    %711 = vmatpush.bf16.msra.mxu0 0
    %712 = vmatpush.bf16.msra.mxu0 0
    %713 = vmatpush.bf16.msra.mxu0 0
    %714 = vmatpush.bf16.msra.mxu0 0
    %715 = vmatpush.bf16.msra.mxu0 0
    %716 = vmatpush.bf16.msra.mxu0 %v707
    %717 = vmatmul.bf16.gmra.mxu0 %v704
    %v718 = vpop.f32.mrf.mxu0
    %v719 = vadd.f32 0.0, %v718
    %v720 = vpop.f32.mrf.mxu0
    %721 = vdwg.mxu0
    %v723 = vsel %vm548, %v641, 0
    %v726 = vsel %vm648, %v390, 0
    %728 = vmatpush.bf16.msra.mxu0 0
    %729 = vmatpush.bf16.msra.mxu0 0
    %730 = vmatpush.bf16.msra.mxu0 0
    %731 = vmatpush.bf16.msra.mxu0 0
    %732 = vmatpush.bf16.msra.mxu0 0
    %733 = vmatpush.bf16.msra.mxu0 0
    %734 = vmatpush.bf16.msra.mxu0 0
    %735 = vmatpush.bf16.msra.mxu0 %v726
    %736 = vmatmul.bf16.gmra.mxu0 %v723
    %v737 = vpop.f32.mrf.mxu0
    %v738 = vadd.f32 0.0, %v737
    %v739 = vpop.f32.mrf.mxu0
    %740 = vdwg.mxu0
    %v742 = vsel %vm548, %v642, 0
    %v745 = vsel %vm648, %v391, 0
    %747 = vmatpush.bf16.msra.mxu0 0
    %748 = vmatpush.bf16.msra.mxu0 0
    %749 = vmatpush.bf16.msra.mxu0 0
    %750 = vmatpush.bf16.msra.mxu0 0
    %751 = vmatpush.bf16.msra.mxu0 0
    %752 = vmatpush.bf16.msra.mxu0 0
    %753 = vmatpush.bf16.msra.mxu0 0
    %754 = vmatpush.bf16.msra.mxu0 %v745
    %755 = vmatmul.bf16.gmra.mxu0 %v742
    %v756 = vpop.f32.mrf.mxu0
    %v757 = vadd.f32 0.0, %v756
    %v758 = vpop.f32.mrf.mxu0
    %759 = vdwg.mxu0
    %v761 = vsel %vm548, %v643, 0
    %v764 = vsel %vm648, %v392, 0
    %766 = vmatpush.bf16.msra.mxu0 0
    %767 = vmatpush.bf16.msra.mxu0 0
    %768 = vmatpush.bf16.msra.mxu0 0
    %769 = vmatpush.bf16.msra.mxu0 0
    %770 = vmatpush.bf16.msra.mxu0 0
    %771 = vmatpush.bf16.msra.mxu0 0
    %772 = vmatpush.bf16.msra.mxu0 0
    %773 = vmatpush.bf16.msra.mxu0 %v764
    %774 = vmatmul.bf16.gmra.mxu0 %v761
    %v775 = vpop.f32.mrf.mxu0
    %v776 = vadd.f32 0.0, %v775
    %v777 = vpop.f32.mrf.mxu0
    %778 = vdwg.mxu0
    %v780 = vsel %vm548, %v644, 0
    %v783 = vsel %vm648, %v393, 0
    %785 = vmatpush.bf16.msra.mxu0 0
    %786 = vmatpush.bf16.msra.mxu0 0
    %787 = vmatpush.bf16.msra.mxu0 0
    %788 = vmatpush.bf16.msra.mxu0 0
    %789 = vmatpush.bf16.msra.mxu0 0
    %790 = vmatpush.bf16.msra.mxu0 0
    %791 = vmatpush.bf16.msra.mxu0 0
    %792 = vmatpush.bf16.msra.mxu0 %v783
    %793 = vmatmul.bf16.gmra.mxu0 %v780
    %v794 = vpop.f32.mrf.mxu0
    %v795 = vadd.f32 0.0, %v794
    %v796 = vpop.f32.mrf.mxu0
    %797 = vdwg.mxu0
    %v798 = vpack.c.bf16 %v681, %v662
    %v799 = vpack.c.bf16 %v719, %v700
    %v800 = vpack.c.bf16 %v757, %v738
    %v801 = vpack.c.bf16 %v795, %v776
    %v802 = vld [vmem:[%s7] sm:$0xf]
    %v803 = vld [vmem:[%s7 + $0x4] sm:$0xf]
    %v804 = vld [vmem:[%s7 + $0x8] sm:$0xf]
    %v805 = vld [vmem:[%s7 + $0xc] sm:$0xf]
    %v807 = vunpack.c.l.b16 %v152
    %v808 = vpack.c.b16 %v807, %v807
    %809 = vrot.lane.b32.xlu0 %v808, 96
    %v810 = vpop.permute.xlu0 %809
    %v812 = vunpack.c.l.b16 %v269
    %v813 = vpack.c.b16 %v812, %v812
    %814 = vrot.lane.b32.xlu0 %v813, 96
    %v815 = vpop.permute.xlu0 %814
    %v817 = vsel %vm395, %v810, 0
    %v820 = vsel %vm395, %v815, 0
    %822 = vmatpush.bf16.xpose.msra.mxu0 0
    %823 = vmatpush.bf16.xpose.msra.mxu0 0
    %824 = vmatpush.bf16.xpose.msra.mxu0 0
    %825 = vmatpush.bf16.xpose.msra.mxu0 0
    %826 = vmatpush.bf16.xpose.msra.mxu0 0
    %827 = vmatpush.bf16.xpose.msra.mxu0 0
    %828 = vmatpush.bf16.xpose.msra.mxu0 0
    %829 = vmatpush.bf16.xpose.msra.mxu0 %v820
    %830 = vmatmul.bf16.gmra.mxu0 %v817
    %v831 = vpop.f32.mrf.mxu0
    %v832 = vadd.f32 %v394, %v831
    %v833 = vpop.f32.mrf.mxu0
    %834 = vdwg.mxu0
    %v836 = vunpack.c.l.b16 %v153
    %v837 = vpack.c.b16 %v836, %v836
    %838 = vrot.lane.b32.xlu0 %v837, 96
    %v839 = vpop.permute.xlu0 %838
    %v841 = vunpack.c.l.b16 %v270
    %v842 = vpack.c.b16 %v841, %v841
    %843 = vrot.lane.b32.xlu0 %v842, 96
    %v844 = vpop.permute.xlu0 %843
    %v846 = vsel %vm395, %v839, 0
    %v849 = vsel %vm395, %v844, 0
    %851 = vmatpush.bf16.xpose.msra.mxu0 0
    %852 = vmatpush.bf16.xpose.msra.mxu0 0
    %853 = vmatpush.bf16.xpose.msra.mxu0 0
    %854 = vmatpush.bf16.xpose.msra.mxu0 0
    %855 = vmatpush.bf16.xpose.msra.mxu0 0
    %856 = vmatpush.bf16.xpose.msra.mxu0 0
    %857 = vmatpush.bf16.xpose.msra.mxu0 0
    %858 = vmatpush.bf16.xpose.msra.mxu0 %v849
    %859 = vmatmul.bf16.gmra.mxu0 %v846
    %v860 = vpop.f32.mrf.mxu0
    %v861 = vadd.f32 %v394, %v860
    %v862 = vpop.f32.mrf.mxu0
    %863 = vdwg.mxu0
    %v865 = vunpack.c.l.b16 %v154
    %v866 = vpack.c.b16 %v865, %v865
    %867 = vrot.lane.b32.xlu0 %v866, 96
    %v868 = vpop.permute.xlu0 %867
    %v870 = vunpack.c.l.b16 %v271
    %v871 = vpack.c.b16 %v870, %v870
    %872 = vrot.lane.b32.xlu0 %v871, 96
    %v873 = vpop.permute.xlu0 %872
    %v875 = vsel %vm395, %v868, 0
    %v878 = vsel %vm395, %v873, 0
    %880 = vmatpush.bf16.xpose.msra.mxu0 0
    %881 = vmatpush.bf16.xpose.msra.mxu0 0
    %882 = vmatpush.bf16.xpose.msra.mxu0 0
    %883 = vmatpush.bf16.xpose.msra.mxu0 0
    %884 = vmatpush.bf16.xpose.msra.mxu0 0
    %885 = vmatpush.bf16.xpose.msra.mxu0 0
    %886 = vmatpush.bf16.xpose.msra.mxu0 0
    %887 = vmatpush.bf16.xpose.msra.mxu0 %v878
    %888 = vmatmul.bf16.gmra.mxu0 %v875
    %v889 = vpop.f32.mrf.mxu0
    %v890 = vadd.f32 %v394, %v889
    %v891 = vpop.f32.mrf.mxu0
    %892 = vdwg.mxu0
    %v894 = vunpack.c.l.b16 %v155
    %v895 = vpack.c.b16 %v894, %v894
    %896 = vrot.lane.b32.xlu0 %v895, 96
    %v897 = vpop.permute.xlu0 %896
    %v899 = vunpack.c.l.b16 %v272
    %v900 = vpack.c.b16 %v899, %v899
    %901 = vrot.lane.b32.xlu0 %v900, 96
    %v902 = vpop.permute.xlu0 %901
    %v904 = vsel %vm395, %v897, 0
    %v907 = vsel %vm395, %v902, 0
    %909 = vmatpush.bf16.xpose.msra.mxu0 0
    %910 = vmatpush.bf16.xpose.msra.mxu0 0
    %911 = vmatpush.bf16.xpose.msra.mxu0 0
    %912 = vmatpush.bf16.xpose.msra.mxu0 0
    %913 = vmatpush.bf16.xpose.msra.mxu0 0
    %914 = vmatpush.bf16.xpose.msra.mxu0 0
    %915 = vmatpush.bf16.xpose.msra.mxu0 0
    %916 = vmatpush.bf16.xpose.msra.mxu0 %v907
    %917 = vmatmul.bf16.gmra.mxu0 %v904
    %v918 = vpop.f32.mrf.mxu0
    %v919 = vadd.f32 %v394, %v918
    %v920 = vpop.f32.mrf.mxu0
    %921 = vdwg.mxu0
    %v923 = vunpack.c.l.b16 %v156
    %v924 = vpack.c.b16 %v923, %v923
    %925 = vrot.lane.b32.xlu0 %v924, 96
    %v926 = vpop.permute.xlu0 %925
    %v928 = vunpack.c.l.b16 %v273
    %v929 = vpack.c.b16 %v928, %v928
    %930 = vrot.lane.b32.xlu0 %v929, 96
    %v931 = vpop.permute.xlu0 %930
    %v933 = vsel %vm395, %v926, 0
    %v936 = vsel %vm395, %v931, 0
    %938 = vmatpush.bf16.xpose.msra.mxu0 0
    %939 = vmatpush.bf16.xpose.msra.mxu0 0
    %940 = vmatpush.bf16.xpose.msra.mxu0 0
    %941 = vmatpush.bf16.xpose.msra.mxu0 0
    %942 = vmatpush.bf16.xpose.msra.mxu0 0
    %943 = vmatpush.bf16.xpose.msra.mxu0 0
    %944 = vmatpush.bf16.xpose.msra.mxu0 0
    %945 = vmatpush.bf16.xpose.msra.mxu0 %v936
    %946 = vmatmul.bf16.gmra.mxu0 %v933
    %v947 = vpop.f32.mrf.mxu0
    %v948 = vadd.f32 %v394, %v947
    %v949 = vpop.f32.mrf.mxu0
    %950 = vdwg.mxu0
    %v952 = vunpack.c.l.b16 %v157
    %v953 = vpack.c.b16 %v952, %v952
    %954 = vrot.lane.b32.xlu0 %v953, 96
    %v955 = vpop.permute.xlu0 %954
    %v957 = vunpack.c.l.b16 %v274
    %v958 = vpack.c.b16 %v957, %v957
    %959 = vrot.lane.b32.xlu0 %v958, 96
    %v960 = vpop.permute.xlu0 %959
    %v962 = vsel %vm395, %v955, 0
    %v965 = vsel %vm395, %v960, 0
    %967 = vmatpush.bf16.xpose.msra.mxu0 0
    %968 = vmatpush.bf16.xpose.msra.mxu0 0
    %969 = vmatpush.bf16.xpose.msra.mxu0 0
    %970 = vmatpush.bf16.xpose.msra.mxu0 0
    %971 = vmatpush.bf16.xpose.msra.mxu0 0
    %972 = vmatpush.bf16.xpose.msra.mxu0 0
    %973 = vmatpush.bf16.xpose.msra.mxu0 0
    %974 = vmatpush.bf16.xpose.msra.mxu0 %v965
    %975 = vmatmul.bf16.gmra.mxu0 %v962
    %v976 = vpop.f32.mrf.mxu0
    %v977 = vadd.f32 %v394, %v976
    %v978 = vpop.f32.mrf.mxu0
    %979 = vdwg.mxu0
    %v981 = vunpack.c.l.b16 %v158
    %v982 = vpack.c.b16 %v981, %v981
    %983 = vrot.lane.b32.xlu0 %v982, 96
    %v984 = vpop.permute.xlu0 %983
    %v986 = vunpack.c.l.b16 %v275
    %v987 = vpack.c.b16 %v986, %v986
    %988 = vrot.lane.b32.xlu0 %v987, 96
    %v989 = vpop.permute.xlu0 %988
    %v991 = vsel %vm395, %v984, 0
    %v994 = vsel %vm395, %v989, 0
    %996 = vmatpush.bf16.xpose.msra.mxu0 0
    %997 = vmatpush.bf16.xpose.msra.mxu0 0
    %998 = vmatpush.bf16.xpose.msra.mxu0 0
    %999 = vmatpush.bf16.xpose.msra.mxu0 0
    %1000 = vmatpush.bf16.xpose.msra.mxu0 0
    %1001 = vmatpush.bf16.xpose.msra.mxu0 0
    %1002 = vmatpush.bf16.xpose.msra.mxu0 0
    %1003 = vmatpush.bf16.xpose.msra.mxu0 %v994
    %1004 = vmatmul.bf16.gmra.mxu0 %v991
    %v1005 = vpop.f32.mrf.mxu0
    %v1006 = vadd.f32 %v394, %v1005
    %v1007 = vpop.f32.mrf.mxu0
    %1008 = vdwg.mxu0
    %v1010 = vunpack.c.l.b16 %v159
    %v1011 = vpack.c.b16 %v1010, %v1010
    %1012 = vrot.lane.b32.xlu0 %v1011, 96
    %v1013 = vpop.permute.xlu0 %1012
    %v1015 = vunpack.c.l.b16 %v276
    %v1016 = vpack.c.b16 %v1015, %v1015
    %1017 = vrot.lane.b32.xlu0 %v1016, 96
    %v1018 = vpop.permute.xlu0 %1017
    %v1020 = vsel %vm395, %v1013, 0
    %v1023 = vsel %vm395, %v1018, 0
    %1025 = vmatpush.bf16.xpose.msra.mxu0 0
    %1026 = vmatpush.bf16.xpose.msra.mxu0 0
    %1027 = vmatpush.bf16.xpose.msra.mxu0 0
    %1028 = vmatpush.bf16.xpose.msra.mxu0 0
    %1029 = vmatpush.bf16.xpose.msra.mxu0 0
    %1030 = vmatpush.bf16.xpose.msra.mxu0 0
    %1031 = vmatpush.bf16.xpose.msra.mxu0 0
    %1032 = vmatpush.bf16.xpose.msra.mxu0 %v1023
    %1033 = vmatmul.bf16.gmra.mxu0 %v1020
    %v1034 = vpop.f32.mrf.mxu0
    %v1035 = vadd.f32 %v394, %v1034
    %v1036 = vpop.f32.mrf.mxu0
    %1037 = vdwg.mxu0
    %v1038 = vsel %vm548, %v832, -inf
    %1039 = vmax.xlane.f32.xlu0 %v1038
    %v1040 = vpop.xlane.xlu0 %1039
    %v1041 = vsel %vm548, %v861, -inf
    %1042 = vmax.xlane.f32.xlu0 %v1041
    %v1043 = vpop.xlane.xlu0 %1042
    %v1044 = vsel %vm548, %v890, -inf
    %1045 = vmax.xlane.f32.xlu0 %v1044
    %v1046 = vpop.xlane.xlu0 %1045
    %v1047 = vsel %vm548, %v919, -inf
    %1048 = vmax.xlane.f32.xlu0 %v1047
    %v1049 = vpop.xlane.xlu0 %1048
    %v1050 = vsel %vm548, %v948, -inf
    %1051 = vmax.xlane.f32.xlu0 %v1050
    %v1052 = vpop.xlane.xlu0 %1051
    %v1053 = vsel %vm548, %v977, -inf
    %1054 = vmax.xlane.f32.xlu0 %v1053
    %v1055 = vpop.xlane.xlu0 %1054
    %v1056 = vsel %vm548, %v1006, -inf
    %1057 = vmax.xlane.f32.xlu0 %v1056
    %v1058 = vpop.xlane.xlu0 %1057
    %v1059 = vsel %vm548, %v1035, -inf
    %1060 = vmax.xlane.f32.xlu0 %v1059
    %v1061 = vpop.xlane.xlu0 %1060
    %v1062 = vsub.f32 %v832, %v1040
    %v1063 = vsub.f32 %v861, %v1043
    %v1064 = vsub.f32 %v890, %v1046
    %v1065 = vsub.f32 %v919, %v1049
    %v1066 = vsub.f32 %v948, %v1052
    %v1067 = vsub.f32 %v977, %v1055
    %v1068 = vsub.f32 %v1006, %v1058
    %v1069 = vsub.f32 %v1035, %v1061
    %v1070 = vmul.f32 %v1062, 1.442695
    %v1071 = vpow.pop %v1070
    %v1072 = vmul.f32 %v1063, 1.442695
    %v1073 = vpow.pop %v1072
    %v1074 = vmul.f32 %v1064, 1.442695
    %v1075 = vpow.pop %v1074
    %v1076 = vmul.f32 %v1065, 1.442695
    %v1077 = vpow.pop %v1076
    %v1078 = vmul.f32 %v1066, 1.442695
    %v1079 = vpow.pop %v1078
    %v1080 = vmul.f32 %v1067, 1.442695
    %v1081 = vpow.pop %v1080
    %v1082 = vmul.f32 %v1068, 1.442695
    %v1083 = vpow.pop %v1082
    %v1084 = vmul.f32 %v1069, 1.442695
    %v1085 = vpow.pop %v1084
    %v1086 = vsel %vm548, %v1071, 0.0
    %1087 = vadd.xlane.f32.xlu0 %v1086
    %v1088 = vpop.xlane.xlu0 %1087
    %v1089 = vsel %vm548, %v1073, 0.0
    %1090 = vadd.xlane.f32.xlu0 %v1089
    %v1091 = vpop.xlane.xlu0 %1090
    %v1092 = vsel %vm548, %v1075, 0.0
    %1093 = vadd.xlane.f32.xlu0 %v1092
    %v1094 = vpop.xlane.xlu0 %1093
    %v1095 = vsel %vm548, %v1077, 0.0
    %1096 = vadd.xlane.f32.xlu0 %v1095
    %v1097 = vpop.xlane.xlu0 %1096
    %v1098 = vsel %vm548, %v1079, 0.0
    %1099 = vadd.xlane.f32.xlu0 %v1098
    %v1100 = vpop.xlane.xlu0 %1099
    %v1101 = vsel %vm548, %v1081, 0.0
    %1102 = vadd.xlane.f32.xlu0 %v1101
    %v1103 = vpop.xlane.xlu0 %1102
    %v1104 = vsel %vm548, %v1083, 0.0
    %1105 = vadd.xlane.f32.xlu0 %v1104
    %v1106 = vpop.xlane.xlu0 %1105
    %v1107 = vsel %vm548, %v1085, 0.0
    %1108 = vadd.xlane.f32.xlu0 %v1107
    %v1109 = vpop.xlane.xlu0 %1108
    %v1110 = vrcp.pop %v1088
    %v1111 = vrcp.pop %v1091
    %v1112 = vrcp.pop %v1094
    %v1113 = vrcp.pop %v1097
    %v1114 = vrcp.pop %v1100
    %v1115 = vrcp.pop %v1103
    %v1116 = vrcp.pop %v1106
    %v1117 = vrcp.pop %v1109
    %v1118 = vmul.f32 %v1071, %v1110
    %v1119 = vmul.f32 %v1073, %v1111
    %v1120 = vmul.f32 %v1075, %v1112
    %v1121 = vmul.f32 %v1077, %v1113
    %v1122 = vmul.f32 %v1079, %v1114
    %v1123 = vmul.f32 %v1081, %v1115
    %v1124 = vmul.f32 %v1083, %v1116
    %v1125 = vmul.f32 %v1085, %v1117
    %v1126 = vpack.c.bf16 %v1118, %v1118
    %v1127 = vpack.c.bf16 %v1119, %v1119
    %v1128 = vpack.c.bf16 %v1120, %v1120
    %v1129 = vpack.c.bf16 %v1121, %v1121
    %v1130 = vpack.c.bf16 %v1122, %v1122
    %v1131 = vpack.c.bf16 %v1123, %v1123
    %v1132 = vpack.c.bf16 %v1124, %v1124
    %v1133 = vpack.c.bf16 %v1125, %v1125
    %v1135 = vunpack.c.l.b16 %v386
    %v1136 = vpack.c.b16 %v1135, %v1135
    %1137 = vrot.lane.b32.xlu0 %v1136, 96
    %v1138 = vpop.permute.xlu0 %1137
    %v1140 = vsel %vm548, %v1126, 0
    %v1143 = vsel %vm648, %v1138, 0
    %1145 = vmatpush.bf16.msra.mxu0 0
    %1146 = vmatpush.bf16.msra.mxu0 0
    %1147 = vmatpush.bf16.msra.mxu0 0
    %1148 = vmatpush.bf16.msra.mxu0 0
    %1149 = vmatpush.bf16.msra.mxu0 0
    %1150 = vmatpush.bf16.msra.mxu0 0
    %1151 = vmatpush.bf16.msra.mxu0 0
    %1152 = vmatpush.bf16.msra.mxu0 %v1143
    %1153 = vmatmul.bf16.gmra.mxu0 %v1140
    %v1154 = vpop.f32.mrf.mxu0
    %v1155 = vadd.f32 0.0, %v1154
    %v1156 = vpop.f32.mrf.mxu0
    %1157 = vdwg.mxu0
    %v1159 = vunpack.c.l.b16 %v387
    %v1160 = vpack.c.b16 %v1159, %v1159
    %1161 = vrot.lane.b32.xlu0 %v1160, 96
    %v1162 = vpop.permute.xlu0 %1161
    %v1164 = vsel %vm548, %v1127, 0
    %v1167 = vsel %vm648, %v1162, 0
    %1169 = vmatpush.bf16.msra.mxu0 0
    %1170 = vmatpush.bf16.msra.mxu0 0
    %1171 = vmatpush.bf16.msra.mxu0 0
    %1172 = vmatpush.bf16.msra.mxu0 0
    %1173 = vmatpush.bf16.msra.mxu0 0
    %1174 = vmatpush.bf16.msra.mxu0 0
    %1175 = vmatpush.bf16.msra.mxu0 0
    %1176 = vmatpush.bf16.msra.mxu0 %v1167
    %1177 = vmatmul.bf16.gmra.mxu0 %v1164
    %v1178 = vpop.f32.mrf.mxu0
    %v1179 = vadd.f32 0.0, %v1178
    %v1180 = vpop.f32.mrf.mxu0
    %1181 = vdwg.mxu0
    %v1183 = vunpack.c.l.b16 %v388
    %v1184 = vpack.c.b16 %v1183, %v1183
    %1185 = vrot.lane.b32.xlu0 %v1184, 96
    %v1186 = vpop.permute.xlu0 %1185
    %v1188 = vsel %vm548, %v1128, 0
    %v1191 = vsel %vm648, %v1186, 0
    %1193 = vmatpush.bf16.msra.mxu0 0
    %1194 = vmatpush.bf16.msra.mxu0 0
    %1195 = vmatpush.bf16.msra.mxu0 0
    %1196 = vmatpush.bf16.msra.mxu0 0
    %1197 = vmatpush.bf16.msra.mxu0 0
    %1198 = vmatpush.bf16.msra.mxu0 0
    %1199 = vmatpush.bf16.msra.mxu0 0
    %1200 = vmatpush.bf16.msra.mxu0 %v1191
    %1201 = vmatmul.bf16.gmra.mxu0 %v1188
    %v1202 = vpop.f32.mrf.mxu0
    %v1203 = vadd.f32 0.0, %v1202
    %v1204 = vpop.f32.mrf.mxu0
    %1205 = vdwg.mxu0
    %v1207 = vunpack.c.l.b16 %v389
    %v1208 = vpack.c.b16 %v1207, %v1207
    %1209 = vrot.lane.b32.xlu0 %v1208, 96
    %v1210 = vpop.permute.xlu0 %1209
    %v1212 = vsel %vm548, %v1129, 0
    %v1215 = vsel %vm648, %v1210, 0
    %1217 = vmatpush.bf16.msra.mxu0 0
    %1218 = vmatpush.bf16.msra.mxu0 0
    %1219 = vmatpush.bf16.msra.mxu0 0
    %1220 = vmatpush.bf16.msra.mxu0 0
    %1221 = vmatpush.bf16.msra.mxu0 0
    %1222 = vmatpush.bf16.msra.mxu0 0
    %1223 = vmatpush.bf16.msra.mxu0 0
    %1224 = vmatpush.bf16.msra.mxu0 %v1215
    %1225 = vmatmul.bf16.gmra.mxu0 %v1212
    %v1226 = vpop.f32.mrf.mxu0
    %v1227 = vadd.f32 0.0, %v1226
    %v1228 = vpop.f32.mrf.mxu0
    %1229 = vdwg.mxu0
    %v1231 = vunpack.c.l.b16 %v390
    %v1232 = vpack.c.b16 %v1231, %v1231
    %1233 = vrot.lane.b32.xlu0 %v1232, 96
    %v1234 = vpop.permute.xlu0 %1233
    %v1236 = vsel %vm548, %v1130, 0
    %v1239 = vsel %vm648, %v1234, 0
    %1241 = vmatpush.bf16.msra.mxu0 0
    %1242 = vmatpush.bf16.msra.mxu0 0
    %1243 = vmatpush.bf16.msra.mxu0 0
    %1244 = vmatpush.bf16.msra.mxu0 0
    %1245 = vmatpush.bf16.msra.mxu0 0
    %1246 = vmatpush.bf16.msra.mxu0 0
    %1247 = vmatpush.bf16.msra.mxu0 0
    %1248 = vmatpush.bf16.msra.mxu0 %v1239
    %1249 = vmatmul.bf16.gmra.mxu0 %v1236
    %v1250 = vpop.f32.mrf.mxu0
    %v1251 = vadd.f32 0.0, %v1250
    %v1252 = vpop.f32.mrf.mxu0
    %1253 = vdwg.mxu0
    %v1255 = vunpack.c.l.b16 %v391
    %v1256 = vpack.c.b16 %v1255, %v1255
    %1257 = vrot.lane.b32.xlu0 %v1256, 96
    %v1258 = vpop.permute.xlu0 %1257
    %v1260 = vsel %vm548, %v1131, 0
    %v1263 = vsel %vm648, %v1258, 0
    %1265 = vmatpush.bf16.msra.mxu0 0
    %1266 = vmatpush.bf16.msra.mxu0 0
    %1267 = vmatpush.bf16.msra.mxu0 0
    %1268 = vmatpush.bf16.msra.mxu0 0
    %1269 = vmatpush.bf16.msra.mxu0 0
    %1270 = vmatpush.bf16.msra.mxu0 0
    %1271 = vmatpush.bf16.msra.mxu0 0
    %1272 = vmatpush.bf16.msra.mxu0 %v1263
    %1273 = vmatmul.bf16.gmra.mxu0 %v1260
    %v1274 = vpop.f32.mrf.mxu0
    %v1275 = vadd.f32 0.0, %v1274
    %v1276 = vpop.f32.mrf.mxu0
    %1277 = vdwg.mxu0
    %v1279 = vunpack.c.l.b16 %v392
    %v1280 = vpack.c.b16 %v1279, %v1279
    %1281 = vrot.lane.b32.xlu0 %v1280, 96
    %v1282 = vpop.permute.xlu0 %1281
    %v1284 = vsel %vm548, %v1132, 0
    %v1287 = vsel %vm648, %v1282, 0
    %1289 = vmatpush.bf16.msra.mxu0 0
    %1290 = vmatpush.bf16.msra.mxu0 0
    %1291 = vmatpush.bf16.msra.mxu0 0
    %1292 = vmatpush.bf16.msra.mxu0 0
    %1293 = vmatpush.bf16.msra.mxu0 0
    %1294 = vmatpush.bf16.msra.mxu0 0
    %1295 = vmatpush.bf16.msra.mxu0 0
    %1296 = vmatpush.bf16.msra.mxu0 %v1287
    %1297 = vmatmul.bf16.gmra.mxu0 %v1284
    %v1298 = vpop.f32.mrf.mxu0
    %v1299 = vadd.f32 0.0, %v1298
    %v1300 = vpop.f32.mrf.mxu0
    %1301 = vdwg.mxu0
    %v1303 = vunpack.c.l.b16 %v393
    %v1304 = vpack.c.b16 %v1303, %v1303
    %1305 = vrot.lane.b32.xlu0 %v1304, 96
    %v1306 = vpop.permute.xlu0 %1305
    %v1308 = vsel %vm548, %v1133, 0
    %v1311 = vsel %vm648, %v1306, 0
    %1313 = vmatpush.bf16.msra.mxu0 0
    %1314 = vmatpush.bf16.msra.mxu0 0
    %1315 = vmatpush.bf16.msra.mxu0 0
    %1316 = vmatpush.bf16.msra.mxu0 0
    %1317 = vmatpush.bf16.msra.mxu0 0
    %1318 = vmatpush.bf16.msra.mxu0 0
    %1319 = vmatpush.bf16.msra.mxu0 0
    %1320 = vmatpush.bf16.msra.mxu0 %v1311
    %1321 = vmatmul.bf16.gmra.mxu0 %v1308
    %v1322 = vpop.f32.mrf.mxu0
    %v1323 = vadd.f32 0.0, %v1322
    %v1324 = vpop.f32.mrf.mxu0
    %1325 = vdwg.mxu0
    %v1326 = vpack.c.bf16 %v1179, %v1155
    %v1327 = vpack.c.bf16 %v1227, %v1203
    %v1328 = vpack.c.bf16 %v1275, %v1251
    %v1329 = vpack.c.bf16 %v1323, %v1299
    %s1330 = scalar_lea.vmem %s7, 16
    %v1331 = vld [vmem:[%s1330] sm:$0xf]
    %v1332 = vld [vmem:[%s1330 + $0x4] sm:$0xf]
    %v1333 = vld [vmem:[%s1330 + $0x8] sm:$0xf]
    %v1334 = vld [vmem:[%s1330 + $0xc] sm:$0xf]
    %v1339 = vunpack.c.l.b16 %v1331
    %v1340 = vunpack.c.l.b16 %v1332
    %v1341 = vunpack.c.l.b16 %v1333
    %v1342 = vunpack.c.l.b16 %v1334
    %v1343 = vpack.c.b16 %v1340, %v1339
    %v1344 = vpack.c.b16 %v1342, %v1341
    %v1348 = vsel %vm395, %v1326, 0
    %v1351 = vsel %vm395, %v1327, 0
    %v1354 = vsel %vm395, %v1328, 0
    %v1357 = vsel %vm395, %v1329, 0
    %1359 = vmatpush.bf16.msra.mxu0 0
    %1360 = vmatpush.bf16.msra.mxu0 0
    %1361 = vmatpush.bf16.msra.mxu0 0
    %1362 = vmatpush.bf16.msra.mxu0 0
    %1363 = vmatpush.bf16.msra.mxu0 0
    %1364 = vmatpush.bf16.msra.mxu0 0
    %1365 = vmatpush.bf16.msra.mxu0 %v1344
    %1366 = vmatpush.bf16.msra.mxu0 %v1343
    %1367 = vmatmul.bf16.gmra.mxu0 %v1348
    %v1368 = vpop.f32.mrf.mxu0
    %v1369 = vadd.f32 0.0, %v1368
    %v1370 = vpop.f32.mrf.mxu0
    %v1371 = vadd.f32 0.0, %v1370
    %1372 = vmatmul.bf16.gmra.mxu0 %v1351
    %v1373 = vpop.f32.mrf.mxu0
    %v1374 = vadd.f32 0.0, %v1373
    %v1375 = vpop.f32.mrf.mxu0
    %v1376 = vadd.f32 0.0, %v1375
    %1377 = vmatmul.bf16.gmra.mxu0 %v1354
    %v1378 = vpop.f32.mrf.mxu0
    %v1379 = vadd.f32 0.0, %v1378
    %v1380 = vpop.f32.mrf.mxu0
    %v1381 = vadd.f32 0.0, %v1380
    %1382 = vmatmul.bf16.gmra.mxu0 %v1357
    %v1383 = vpop.f32.mrf.mxu0
    %v1384 = vadd.f32 0.0, %v1383
    %v1385 = vpop.f32.mrf.mxu0
    %v1386 = vadd.f32 0.0, %v1385
    %1387 = vdwg.mxu0
    %v1392 = vunpack.c.l.b16 %v802
    %v1393 = vunpack.c.l.b16 %v803
    %v1394 = vunpack.c.l.b16 %v804
    %v1395 = vunpack.c.l.b16 %v805
    %v1396 = vpack.c.b16 %v1393, %v1392
    %v1397 = vpack.c.b16 %v1395, %v1394
    %v1401 = vsel %vm395, %v798, 0
    %v1404 = vsel %vm395, %v799, 0
    %v1407 = vsel %vm395, %v800, 0
    %v1410 = vsel %vm395, %v801, 0
    %1412 = vmatpush.bf16.msra.mxu0 0
    %1413 = vmatpush.bf16.msra.mxu0 0
    %1414 = vmatpush.bf16.msra.mxu0 0
    %1415 = vmatpush.bf16.msra.mxu0 0
    %1416 = vmatpush.bf16.msra.mxu0 0
    %1417 = vmatpush.bf16.msra.mxu0 0
    %1418 = vmatpush.bf16.msra.mxu0 %v1397
    %1419 = vmatpush.bf16.msra.mxu0 %v1396
    %1420 = vmatmul.bf16.gmra.mxu0 %v1401
    %v1421 = vpop.f32.mrf.mxu0
    %v1422 = vadd.f32 %v1369, %v1421
    %v1423 = vpop.f32.mrf.mxu0
    %v1424 = vadd.f32 %v1371, %v1423
    %1425 = vmatmul.bf16.gmra.mxu0 %v1404
    %v1426 = vpop.f32.mrf.mxu0
    %v1427 = vadd.f32 %v1374, %v1426
    %v1428 = vpop.f32.mrf.mxu0
    %v1429 = vadd.f32 %v1376, %v1428
    %1430 = vmatmul.bf16.gmra.mxu0 %v1407
    %v1431 = vpop.f32.mrf.mxu0
    %v1432 = vadd.f32 %v1379, %v1431
    %v1433 = vpop.f32.mrf.mxu0
    %v1434 = vadd.f32 %v1381, %v1433
    %1435 = vmatmul.bf16.gmra.mxu0 %v1410
    %v1436 = vpop.f32.mrf.mxu0
    %v1437 = vadd.f32 %v1384, %v1436
    %v1438 = vpop.f32.mrf.mxu0
    %v1439 = vadd.f32 %v1386, %v1438
    %1440 = vdwg.mxu0
    %1441 = vrot.lane.b32.xlu0 %v808, 64
    %v1442 = vpop.permute.xlu0 %1441
    %1443 = vrot.lane.b32.xlu0 %v813, 64
    %v1444 = vpop.permute.xlu0 %1443
    %v1446 = vsel %vm395, %v1442, 0
    %v1449 = vsel %vm395, %v1444, 0
    %1451 = vmatpush.bf16.xpose.msra.mxu0 0
    %1452 = vmatpush.bf16.xpose.msra.mxu0 0
    %1453 = vmatpush.bf16.xpose.msra.mxu0 0
    %1454 = vmatpush.bf16.xpose.msra.mxu0 0
    %1455 = vmatpush.bf16.xpose.msra.mxu0 0
    %1456 = vmatpush.bf16.xpose.msra.mxu0 0
    %1457 = vmatpush.bf16.xpose.msra.mxu0 0
    %1458 = vmatpush.bf16.xpose.msra.mxu0 %v1449
    %1459 = vmatmul.bf16.gmra.mxu0 %v1446
    %v1460 = vpop.f32.mrf.mxu0
    %v1461 = vadd.f32 %v394, %v1460
    %v1462 = vpop.f32.mrf.mxu0
    %1463 = vdwg.mxu0
    %1464 = vrot.lane.b32.xlu0 %v837, 64
    %v1465 = vpop.permute.xlu0 %1464
    %1466 = vrot.lane.b32.xlu0 %v842, 64
    %v1467 = vpop.permute.xlu0 %1466
    %v1469 = vsel %vm395, %v1465, 0
    %v1472 = vsel %vm395, %v1467, 0
    %1474 = vmatpush.bf16.xpose.msra.mxu0 0
    %1475 = vmatpush.bf16.xpose.msra.mxu0 0
    %1476 = vmatpush.bf16.xpose.msra.mxu0 0
    %1477 = vmatpush.bf16.xpose.msra.mxu0 0
    %1478 = vmatpush.bf16.xpose.msra.mxu0 0
    %1479 = vmatpush.bf16.xpose.msra.mxu0 0
    %1480 = vmatpush.bf16.xpose.msra.mxu0 0
    %1481 = vmatpush.bf16.xpose.msra.mxu0 %v1472
    %1482 = vmatmul.bf16.gmra.mxu0 %v1469
    %v1483 = vpop.f32.mrf.mxu0
    %v1484 = vadd.f32 %v394, %v1483
    %v1485 = vpop.f32.mrf.mxu0
    %1486 = vdwg.mxu0
    %1487 = vrot.lane.b32.xlu0 %v866, 64
    %v1488 = vpop.permute.xlu0 %1487
    %1489 = vrot.lane.b32.xlu0 %v871, 64
    %v1490 = vpop.permute.xlu0 %1489
    %v1492 = vsel %vm395, %v1488, 0
    %v1495 = vsel %vm395, %v1490, 0
    %1497 = vmatpush.bf16.xpose.msra.mxu0 0
    %1498 = vmatpush.bf16.xpose.msra.mxu0 0
    %1499 = vmatpush.bf16.xpose.msra.mxu0 0
    %1500 = vmatpush.bf16.xpose.msra.mxu0 0
    %1501 = vmatpush.bf16.xpose.msra.mxu0 0
    %1502 = vmatpush.bf16.xpose.msra.mxu0 0
    %1503 = vmatpush.bf16.xpose.msra.mxu0 0
    %1504 = vmatpush.bf16.xpose.msra.mxu0 %v1495
    %1505 = vmatmul.bf16.gmra.mxu0 %v1492
    %v1506 = vpop.f32.mrf.mxu0
    %v1507 = vadd.f32 %v394, %v1506
    %v1508 = vpop.f32.mrf.mxu0
    %1509 = vdwg.mxu0
    %1510 = vrot.lane.b32.xlu0 %v895, 64
    %v1511 = vpop.permute.xlu0 %1510
    %1512 = vrot.lane.b32.xlu0 %v900, 64
    %v1513 = vpop.permute.xlu0 %1512
    %v1515 = vsel %vm395, %v1511, 0
    %v1518 = vsel %vm395, %v1513, 0
    %1520 = vmatpush.bf16.xpose.msra.mxu0 0
    %1521 = vmatpush.bf16.xpose.msra.mxu0 0
    %1522 = vmatpush.bf16.xpose.msra.mxu0 0
    %1523 = vmatpush.bf16.xpose.msra.mxu0 0
    %1524 = vmatpush.bf16.xpose.msra.mxu0 0
    %1525 = vmatpush.bf16.xpose.msra.mxu0 0
    %1526 = vmatpush.bf16.xpose.msra.mxu0 0
    %1527 = vmatpush.bf16.xpose.msra.mxu0 %v1518
    %1528 = vmatmul.bf16.gmra.mxu0 %v1515
    %v1529 = vpop.f32.mrf.mxu0
    %v1530 = vadd.f32 %v394, %v1529
    %v1531 = vpop.f32.mrf.mxu0
    %1532 = vdwg.mxu0
    %1533 = vrot.lane.b32.xlu0 %v924, 64
    %v1534 = vpop.permute.xlu0 %1533
    %1535 = vrot.lane.b32.xlu0 %v929, 64
    %v1536 = vpop.permute.xlu0 %1535
    %v1538 = vsel %vm395, %v1534, 0
    %v1541 = vsel %vm395, %v1536, 0
    %1543 = vmatpush.bf16.xpose.msra.mxu0 0
    %1544 = vmatpush.bf16.xpose.msra.mxu0 0
    %1545 = vmatpush.bf16.xpose.msra.mxu0 0
    %1546 = vmatpush.bf16.xpose.msra.mxu0 0
    %1547 = vmatpush.bf16.xpose.msra.mxu0 0
    %1548 = vmatpush.bf16.xpose.msra.mxu0 0
    %1549 = vmatpush.bf16.xpose.msra.mxu0 0
    %1550 = vmatpush.bf16.xpose.msra.mxu0 %v1541
    %1551 = vmatmul.bf16.gmra.mxu0 %v1538
    %v1552 = vpop.f32.mrf.mxu0
    %v1553 = vadd.f32 %v394, %v1552
    %v1554 = vpop.f32.mrf.mxu0
    %1555 = vdwg.mxu0
    %1556 = vrot.lane.b32.xlu0 %v953, 64
    %v1557 = vpop.permute.xlu0 %1556
    %1558 = vrot.lane.b32.xlu0 %v958, 64
    %v1559 = vpop.permute.xlu0 %1558
    %v1561 = vsel %vm395, %v1557, 0
    %v1564 = vsel %vm395, %v1559, 0
    %1566 = vmatpush.bf16.xpose.msra.mxu0 0
    %1567 = vmatpush.bf16.xpose.msra.mxu0 0
    %1568 = vmatpush.bf16.xpose.msra.mxu0 0
    %1569 = vmatpush.bf16.xpose.msra.mxu0 0
    %1570 = vmatpush.bf16.xpose.msra.mxu0 0
    %1571 = vmatpush.bf16.xpose.msra.mxu0 0
    %1572 = vmatpush.bf16.xpose.msra.mxu0 0
    %1573 = vmatpush.bf16.xpose.msra.mxu0 %v1564
    %1574 = vmatmul.bf16.gmra.mxu0 %v1561
    %v1575 = vpop.f32.mrf.mxu0
    %v1576 = vadd.f32 %v394, %v1575
    %v1577 = vpop.f32.mrf.mxu0
    %1578 = vdwg.mxu0
    %1579 = vrot.lane.b32.xlu0 %v982, 64
    %v1580 = vpop.permute.xlu0 %1579
    %1581 = vrot.lane.b32.xlu0 %v987, 64
    %v1582 = vpop.permute.xlu0 %1581
    %v1584 = vsel %vm395, %v1580, 0
    %v1587 = vsel %vm395, %v1582, 0
    %1589 = vmatpush.bf16.xpose.msra.mxu0 0
    %1590 = vmatpush.bf16.xpose.msra.mxu0 0
    %1591 = vmatpush.bf16.xpose.msra.mxu0 0
    %1592 = vmatpush.bf16.xpose.msra.mxu0 0
    %1593 = vmatpush.bf16.xpose.msra.mxu0 0
    %1594 = vmatpush.bf16.xpose.msra.mxu0 0
    %1595 = vmatpush.bf16.xpose.msra.mxu0 0
    %1596 = vmatpush.bf16.xpose.msra.mxu0 %v1587
    %1597 = vmatmul.bf16.gmra.mxu0 %v1584
    %v1598 = vpop.f32.mrf.mxu0
    %v1599 = vadd.f32 %v394, %v1598
    %v1600 = vpop.f32.mrf.mxu0
    %1601 = vdwg.mxu0
    %1602 = vrot.lane.b32.xlu0 %v1011, 64
    %v1603 = vpop.permute.xlu0 %1602
    %1604 = vrot.lane.b32.xlu0 %v1016, 64
    %v1605 = vpop.permute.xlu0 %1604
    %v1607 = vsel %vm395, %v1603, 0
    %v1610 = vsel %vm395, %v1605, 0
    %1612 = vmatpush.bf16.xpose.msra.mxu0 0
    %1613 = vmatpush.bf16.xpose.msra.mxu0 0
    %1614 = vmatpush.bf16.xpose.msra.mxu0 0
    %1615 = vmatpush.bf16.xpose.msra.mxu0 0
    %1616 = vmatpush.bf16.xpose.msra.mxu0 0
    %1617 = vmatpush.bf16.xpose.msra.mxu0 0
    %1618 = vmatpush.bf16.xpose.msra.mxu0 0
    %1619 = vmatpush.bf16.xpose.msra.mxu0 %v1610
    %1620 = vmatmul.bf16.gmra.mxu0 %v1607
    %v1621 = vpop.f32.mrf.mxu0
    %v1622 = vadd.f32 %v394, %v1621
    %v1623 = vpop.f32.mrf.mxu0
    %1624 = vdwg.mxu0
    %v1625 = vsel %vm548, %v1461, -inf
    %1626 = vmax.xlane.f32.xlu0 %v1625
    %v1627 = vpop.xlane.xlu0 %1626
    %v1628 = vsel %vm548, %v1484, -inf
    %1629 = vmax.xlane.f32.xlu0 %v1628
    %v1630 = vpop.xlane.xlu0 %1629
    %v1631 = vsel %vm548, %v1507, -inf
    %1632 = vmax.xlane.f32.xlu0 %v1631
    %v1633 = vpop.xlane.xlu0 %1632
    %v1634 = vsel %vm548, %v1530, -inf
    %1635 = vmax.xlane.f32.xlu0 %v1634
    %v1636 = vpop.xlane.xlu0 %1635
    %v1637 = vsel %vm548, %v1553, -inf
    %1638 = vmax.xlane.f32.xlu0 %v1637
    %v1639 = vpop.xlane.xlu0 %1638
    %v1640 = vsel %vm548, %v1576, -inf
    %1641 = vmax.xlane.f32.xlu0 %v1640
    %v1642 = vpop.xlane.xlu0 %1641
    %v1643 = vsel %vm548, %v1599, -inf
    %1644 = vmax.xlane.f32.xlu0 %v1643
    %v1645 = vpop.xlane.xlu0 %1644
    %v1646 = vsel %vm548, %v1622, -inf
    %1647 = vmax.xlane.f32.xlu0 %v1646
    %v1648 = vpop.xlane.xlu0 %1647
    %v1649 = vsub.f32 %v1461, %v1627
    %v1650 = vsub.f32 %v1484, %v1630
    %v1651 = vsub.f32 %v1507, %v1633
    %v1652 = vsub.f32 %v1530, %v1636
    %v1653 = vsub.f32 %v1553, %v1639
    %v1654 = vsub.f32 %v1576, %v1642
    %v1655 = vsub.f32 %v1599, %v1645
    %v1656 = vsub.f32 %v1622, %v1648
    %v1657 = vmul.f32 %v1649, 1.442695
    %v1658 = vpow.pop %v1657
    %v1659 = vmul.f32 %v1650, 1.442695
    %v1660 = vpow.pop %v1659
    %v1661 = vmul.f32 %v1651, 1.442695
    %v1662 = vpow.pop %v1661
    %v1663 = vmul.f32 %v1652, 1.442695
    %v1664 = vpow.pop %v1663
    %v1665 = vmul.f32 %v1653, 1.442695
    %v1666 = vpow.pop %v1665
    %v1667 = vmul.f32 %v1654, 1.442695
    %v1668 = vpow.pop %v1667
    %v1669 = vmul.f32 %v1655, 1.442695
    %v1670 = vpow.pop %v1669
    %v1671 = vmul.f32 %v1656, 1.442695
    %v1672 = vpow.pop %v1671
    %v1673 = vsel %vm548, %v1658, 0.0
    %1674 = vadd.xlane.f32.xlu0 %v1673
    %v1675 = vpop.xlane.xlu0 %1674
    %v1676 = vsel %vm548, %v1660, 0.0
    %1677 = vadd.xlane.f32.xlu0 %v1676
    %v1678 = vpop.xlane.xlu0 %1677
    %v1679 = vsel %vm548, %v1662, 0.0
    %1680 = vadd.xlane.f32.xlu0 %v1679
    %v1681 = vpop.xlane.xlu0 %1680
    %v1682 = vsel %vm548, %v1664, 0.0
    %1683 = vadd.xlane.f32.xlu0 %v1682
    %v1684 = vpop.xlane.xlu0 %1683
    %v1685 = vsel %vm548, %v1666, 0.0
    %1686 = vadd.xlane.f32.xlu0 %v1685
    %v1687 = vpop.xlane.xlu0 %1686
    %v1688 = vsel %vm548, %v1668, 0.0
    %1689 = vadd.xlane.f32.xlu0 %v1688
    %v1690 = vpop.xlane.xlu0 %1689
    %v1691 = vsel %vm548, %v1670, 0.0
    %1692 = vadd.xlane.f32.xlu0 %v1691
    %v1693 = vpop.xlane.xlu0 %1692
    %v1694 = vsel %vm548, %v1672, 0.0
    %1695 = vadd.xlane.f32.xlu0 %v1694
    %v1696 = vpop.xlane.xlu0 %1695
    %v1697 = vrcp.pop %v1675
    %v1698 = vrcp.pop %v1678
    %v1699 = vrcp.pop %v1681
    %v1700 = vrcp.pop %v1684
    %v1701 = vrcp.pop %v1687
    %v1702 = vrcp.pop %v1690
    %v1703 = vrcp.pop %v1693
    %v1704 = vrcp.pop %v1696
    %v1705 = vmul.f32 %v1658, %v1697
    %v1706 = vmul.f32 %v1660, %v1698
    %v1707 = vmul.f32 %v1662, %v1699
    %v1708 = vmul.f32 %v1664, %v1700
    %v1709 = vmul.f32 %v1666, %v1701
    %v1710 = vmul.f32 %v1668, %v1702
    %v1711 = vmul.f32 %v1670, %v1703
    %v1712 = vmul.f32 %v1672, %v1704
    %v1713 = vpack.c.bf16 %v1705, %v1705
    %v1714 = vpack.c.bf16 %v1706, %v1706
    %v1715 = vpack.c.bf16 %v1707, %v1707
    %v1716 = vpack.c.bf16 %v1708, %v1708
    %v1717 = vpack.c.bf16 %v1709, %v1709
    %v1718 = vpack.c.bf16 %v1710, %v1710
    %v1719 = vpack.c.bf16 %v1711, %v1711
    %v1720 = vpack.c.bf16 %v1712, %v1712
    %1721 = vrot.lane.b32.xlu0 %v1136, 64
    %v1722 = vpop.permute.xlu0 %1721
    %v1724 = vsel %vm548, %v1713, 0
    %v1727 = vsel %vm648, %v1722, 0
    %1729 = vmatpush.bf16.msra.mxu0 0
    %1730 = vmatpush.bf16.msra.mxu0 0
    %1731 = vmatpush.bf16.msra.mxu0 0
    %1732 = vmatpush.bf16.msra.mxu0 0
    %1733 = vmatpush.bf16.msra.mxu0 0
    %1734 = vmatpush.bf16.msra.mxu0 0
    %1735 = vmatpush.bf16.msra.mxu0 0
    %1736 = vmatpush.bf16.msra.mxu0 %v1727
    %1737 = vmatmul.bf16.gmra.mxu0 %v1724
    %v1738 = vpop.f32.mrf.mxu0
    %v1739 = vadd.f32 0.0, %v1738
    %v1740 = vpop.f32.mrf.mxu0
    %1741 = vdwg.mxu0
    %1742 = vrot.lane.b32.xlu0 %v1160, 64
    %v1743 = vpop.permute.xlu0 %1742
    %v1745 = vsel %vm548, %v1714, 0
    %v1748 = vsel %vm648, %v1743, 0
    %1750 = vmatpush.bf16.msra.mxu0 0
    %1751 = vmatpush.bf16.msra.mxu0 0
    %1752 = vmatpush.bf16.msra.mxu0 0
    %1753 = vmatpush.bf16.msra.mxu0 0
    %1754 = vmatpush.bf16.msra.mxu0 0
    %1755 = vmatpush.bf16.msra.mxu0 0
    %1756 = vmatpush.bf16.msra.mxu0 0
    %1757 = vmatpush.bf16.msra.mxu0 %v1748
    %1758 = vmatmul.bf16.gmra.mxu0 %v1745
    %v1759 = vpop.f32.mrf.mxu0
    %v1760 = vadd.f32 0.0, %v1759
    %v1761 = vpop.f32.mrf.mxu0
    %1762 = vdwg.mxu0
    %1763 = vrot.lane.b32.xlu0 %v1184, 64
    %v1764 = vpop.permute.xlu0 %1763
    %v1766 = vsel %vm548, %v1715, 0
    %v1769 = vsel %vm648, %v1764, 0
    %1771 = vmatpush.bf16.msra.mxu0 0
    %1772 = vmatpush.bf16.msra.mxu0 0
    %1773 = vmatpush.bf16.msra.mxu0 0
    %1774 = vmatpush.bf16.msra.mxu0 0
    %1775 = vmatpush.bf16.msra.mxu0 0
    %1776 = vmatpush.bf16.msra.mxu0 0
    %1777 = vmatpush.bf16.msra.mxu0 0
    %1778 = vmatpush.bf16.msra.mxu0 %v1769
    %1779 = vmatmul.bf16.gmra.mxu0 %v1766
    %v1780 = vpop.f32.mrf.mxu0
    %v1781 = vadd.f32 0.0, %v1780
    %v1782 = vpop.f32.mrf.mxu0
    %1783 = vdwg.mxu0
    %1784 = vrot.lane.b32.xlu0 %v1208, 64
    %v1785 = vpop.permute.xlu0 %1784
    %v1787 = vsel %vm548, %v1716, 0
    %v1790 = vsel %vm648, %v1785, 0
    %1792 = vmatpush.bf16.msra.mxu0 0
    %1793 = vmatpush.bf16.msra.mxu0 0
    %1794 = vmatpush.bf16.msra.mxu0 0
    %1795 = vmatpush.bf16.msra.mxu0 0
    %1796 = vmatpush.bf16.msra.mxu0 0
    %1797 = vmatpush.bf16.msra.mxu0 0
    %1798 = vmatpush.bf16.msra.mxu0 0
    %1799 = vmatpush.bf16.msra.mxu0 %v1790
    %1800 = vmatmul.bf16.gmra.mxu0 %v1787
    %v1801 = vpop.f32.mrf.mxu0
    %v1802 = vadd.f32 0.0, %v1801
    %v1803 = vpop.f32.mrf.mxu0
    %1804 = vdwg.mxu0
    %1805 = vrot.lane.b32.xlu0 %v1232, 64
    %v1806 = vpop.permute.xlu0 %1805
    %v1808 = vsel %vm548, %v1717, 0
    %v1811 = vsel %vm648, %v1806, 0
    %1813 = vmatpush.bf16.msra.mxu0 0
    %1814 = vmatpush.bf16.msra.mxu0 0
    %1815 = vmatpush.bf16.msra.mxu0 0
    %1816 = vmatpush.bf16.msra.mxu0 0
    %1817 = vmatpush.bf16.msra.mxu0 0
    %1818 = vmatpush.bf16.msra.mxu0 0
    %1819 = vmatpush.bf16.msra.mxu0 0
    %1820 = vmatpush.bf16.msra.mxu0 %v1811
    %1821 = vmatmul.bf16.gmra.mxu0 %v1808
    %v1822 = vpop.f32.mrf.mxu0
    %v1823 = vadd.f32 0.0, %v1822
    %v1824 = vpop.f32.mrf.mxu0
    %1825 = vdwg.mxu0
    %1826 = vrot.lane.b32.xlu0 %v1256, 64
    %v1827 = vpop.permute.xlu0 %1826
    %v1829 = vsel %vm548, %v1718, 0
    %v1832 = vsel %vm648, %v1827, 0
    %1834 = vmatpush.bf16.msra.mxu0 0
    %1835 = vmatpush.bf16.msra.mxu0 0
    %1836 = vmatpush.bf16.msra.mxu0 0
    %1837 = vmatpush.bf16.msra.mxu0 0
    %1838 = vmatpush.bf16.msra.mxu0 0
    %1839 = vmatpush.bf16.msra.mxu0 0
    %1840 = vmatpush.bf16.msra.mxu0 0
    %1841 = vmatpush.bf16.msra.mxu0 %v1832
    %1842 = vmatmul.bf16.gmra.mxu0 %v1829
    %v1843 = vpop.f32.mrf.mxu0
    %v1844 = vadd.f32 0.0, %v1843
    %v1845 = vpop.f32.mrf.mxu0
    %1846 = vdwg.mxu0
    %1847 = vrot.lane.b32.xlu0 %v1280, 64
    %v1848 = vpop.permute.xlu0 %1847
    %v1850 = vsel %vm548, %v1719, 0
    %v1853 = vsel %vm648, %v1848, 0
    %1855 = vmatpush.bf16.msra.mxu0 0
    %1856 = vmatpush.bf16.msra.mxu0 0
    %1857 = vmatpush.bf16.msra.mxu0 0
    %1858 = vmatpush.bf16.msra.mxu0 0
    %1859 = vmatpush.bf16.msra.mxu0 0
    %1860 = vmatpush.bf16.msra.mxu0 0
    %1861 = vmatpush.bf16.msra.mxu0 0
    %1862 = vmatpush.bf16.msra.mxu0 %v1853
    %1863 = vmatmul.bf16.gmra.mxu0 %v1850
    %v1864 = vpop.f32.mrf.mxu0
    %v1865 = vadd.f32 0.0, %v1864
    %v1866 = vpop.f32.mrf.mxu0
    %1867 = vdwg.mxu0
    %1868 = vrot.lane.b32.xlu0 %v1304, 64
    %v1869 = vpop.permute.xlu0 %1868
    %v1871 = vsel %vm548, %v1720, 0
    %v1874 = vsel %vm648, %v1869, 0
    %1876 = vmatpush.bf16.msra.mxu0 0
    %1877 = vmatpush.bf16.msra.mxu0 0
    %1878 = vmatpush.bf16.msra.mxu0 0
    %1879 = vmatpush.bf16.msra.mxu0 0
    %1880 = vmatpush.bf16.msra.mxu0 0
    %1881 = vmatpush.bf16.msra.mxu0 0
    %1882 = vmatpush.bf16.msra.mxu0 0
    %1883 = vmatpush.bf16.msra.mxu0 %v1874
    %1884 = vmatmul.bf16.gmra.mxu0 %v1871
    %v1885 = vpop.f32.mrf.mxu0
    %v1886 = vadd.f32 0.0, %v1885
    %v1887 = vpop.f32.mrf.mxu0
    %1888 = vdwg.mxu0
    %v1889 = vpack.c.bf16 %v1760, %v1739
    %v1890 = vpack.c.bf16 %v1802, %v1781
    %v1891 = vpack.c.bf16 %v1844, %v1823
    %v1892 = vpack.c.bf16 %v1886, %v1865
    %s1893 = scalar_lea.vmem %s7, 32
    %v1894 = vld [vmem:[%s1893] sm:$0xf]
    %v1895 = vld [vmem:[%s1893 + $0x4] sm:$0xf]
    %v1896 = vld [vmem:[%s1893 + $0x8] sm:$0xf]
    %v1897 = vld [vmem:[%s1893 + $0xc] sm:$0xf]
    %v1902 = vunpack.c.l.b16 %v1894
    %v1903 = vunpack.c.l.b16 %v1895
    %v1904 = vunpack.c.l.b16 %v1896
    %v1905 = vunpack.c.l.b16 %v1897
    %v1906 = vpack.c.b16 %v1903, %v1902
    %v1907 = vpack.c.b16 %v1905, %v1904
    %v1911 = vsel %vm395, %v1889, 0
    %v1914 = vsel %vm395, %v1890, 0
    %v1917 = vsel %vm395, %v1891, 0
    %v1920 = vsel %vm395, %v1892, 0
    %1922 = vmatpush.bf16.msra.mxu0 0
    %1923 = vmatpush.bf16.msra.mxu0 0
    %1924 = vmatpush.bf16.msra.mxu0 0
    %1925 = vmatpush.bf16.msra.mxu0 0
    %1926 = vmatpush.bf16.msra.mxu0 0
    %1927 = vmatpush.bf16.msra.mxu0 0
    %1928 = vmatpush.bf16.msra.mxu0 %v1907
    %1929 = vmatpush.bf16.msra.mxu0 %v1906
    %1930 = vmatmul.bf16.gmra.mxu0 %v1911
    %v1931 = vpop.f32.mrf.mxu0
    %v1932 = vadd.f32 0.0, %v1931
    %v1933 = vpop.f32.mrf.mxu0
    %v1934 = vadd.f32 0.0, %v1933
    %1935 = vmatmul.bf16.gmra.mxu0 %v1914
    %v1936 = vpop.f32.mrf.mxu0
    %v1937 = vadd.f32 0.0, %v1936
    %v1938 = vpop.f32.mrf.mxu0
    %v1939 = vadd.f32 0.0, %v1938
    %1940 = vmatmul.bf16.gmra.mxu0 %v1917
    %v1941 = vpop.f32.mrf.mxu0
    %v1942 = vadd.f32 0.0, %v1941
    %v1943 = vpop.f32.mrf.mxu0
    %v1944 = vadd.f32 0.0, %v1943
    %1945 = vmatmul.bf16.gmra.mxu0 %v1920
    %v1946 = vpop.f32.mrf.mxu0
    %v1947 = vadd.f32 0.0, %v1946
    %v1948 = vpop.f32.mrf.mxu0
    %v1949 = vadd.f32 0.0, %v1948
    %1950 = vdwg.mxu0
    %v1951 = vadd.f32 %v1422, %v1932
    %v1952 = vadd.f32 %v1424, %v1934
    %v1953 = vadd.f32 %v1427, %v1937
    %v1954 = vadd.f32 %v1429, %v1939
    %v1955 = vadd.f32 %v1432, %v1942
    %v1956 = vadd.f32 %v1434, %v1944
    %v1957 = vadd.f32 %v1437, %v1947
    %v1958 = vadd.f32 %v1439, %v1949
    %1959 = vrot.lane.b32.xlu0 %v808, 32
    %v1960 = vpop.permute.xlu0 %1959
    %1961 = vrot.lane.b32.xlu0 %v813, 32
    %v1962 = vpop.permute.xlu0 %1961
    %v1964 = vsel %vm395, %v1960, 0
    %v1967 = vsel %vm395, %v1962, 0
    %1969 = vmatpush.bf16.xpose.msra.mxu0 0
    %1970 = vmatpush.bf16.xpose.msra.mxu0 0
    %1971 = vmatpush.bf16.xpose.msra.mxu0 0
    %1972 = vmatpush.bf16.xpose.msra.mxu0 0
    %1973 = vmatpush.bf16.xpose.msra.mxu0 0
    %1974 = vmatpush.bf16.xpose.msra.mxu0 0
    %1975 = vmatpush.bf16.xpose.msra.mxu0 0
    %1976 = vmatpush.bf16.xpose.msra.mxu0 %v1967
    %1977 = vmatmul.bf16.gmra.mxu0 %v1964
    %v1978 = vpop.f32.mrf.mxu0
    %v1979 = vadd.f32 %v394, %v1978
    %v1980 = vpop.f32.mrf.mxu0
    %1981 = vdwg.mxu0
    %1982 = vrot.lane.b32.xlu0 %v837, 32
    %v1983 = vpop.permute.xlu0 %1982
    %1984 = vrot.lane.b32.xlu0 %v842, 32
    %v1985 = vpop.permute.xlu0 %1984
    %v1987 = vsel %vm395, %v1983, 0
    %v1990 = vsel %vm395, %v1985, 0
    %1992 = vmatpush.bf16.xpose.msra.mxu0 0
    %1993 = vmatpush.bf16.xpose.msra.mxu0 0
    %1994 = vmatpush.bf16.xpose.msra.mxu0 0
    %1995 = vmatpush.bf16.xpose.msra.mxu0 0
    %1996 = vmatpush.bf16.xpose.msra.mxu0 0
    %1997 = vmatpush.bf16.xpose.msra.mxu0 0
    %1998 = vmatpush.bf16.xpose.msra.mxu0 0
    %1999 = vmatpush.bf16.xpose.msra.mxu0 %v1990
    %2000 = vmatmul.bf16.gmra.mxu0 %v1987
    %v2001 = vpop.f32.mrf.mxu0
    %v2002 = vadd.f32 %v394, %v2001
    %v2003 = vpop.f32.mrf.mxu0
    %2004 = vdwg.mxu0
    %2005 = vrot.lane.b32.xlu0 %v866, 32
    %v2006 = vpop.permute.xlu0 %2005
    %2007 = vrot.lane.b32.xlu0 %v871, 32
    %v2008 = vpop.permute.xlu0 %2007
    %v2010 = vsel %vm395, %v2006, 0
    %v2013 = vsel %vm395, %v2008, 0
    %2015 = vmatpush.bf16.xpose.msra.mxu0 0
    %2016 = vmatpush.bf16.xpose.msra.mxu0 0
    %2017 = vmatpush.bf16.xpose.msra.mxu0 0
    %2018 = vmatpush.bf16.xpose.msra.mxu0 0
    %2019 = vmatpush.bf16.xpose.msra.mxu0 0
    %2020 = vmatpush.bf16.xpose.msra.mxu0 0
    %2021 = vmatpush.bf16.xpose.msra.mxu0 0
    %2022 = vmatpush.bf16.xpose.msra.mxu0 %v2013
    %2023 = vmatmul.bf16.gmra.mxu0 %v2010
    %v2024 = vpop.f32.mrf.mxu0
    %v2025 = vadd.f32 %v394, %v2024
    %v2026 = vpop.f32.mrf.mxu0
    %2027 = vdwg.mxu0
    %2028 = vrot.lane.b32.xlu0 %v895, 32
    %v2029 = vpop.permute.xlu0 %2028
    %2030 = vrot.lane.b32.xlu0 %v900, 32
    %v2031 = vpop.permute.xlu0 %2030
    %v2033 = vsel %vm395, %v2029, 0
    %v2036 = vsel %vm395, %v2031, 0
    %2038 = vmatpush.bf16.xpose.msra.mxu0 0
    %2039 = vmatpush.bf16.xpose.msra.mxu0 0
    %2040 = vmatpush.bf16.xpose.msra.mxu0 0
    %2041 = vmatpush.bf16.xpose.msra.mxu0 0
    %2042 = vmatpush.bf16.xpose.msra.mxu0 0
    %2043 = vmatpush.bf16.xpose.msra.mxu0 0
    %2044 = vmatpush.bf16.xpose.msra.mxu0 0
    %2045 = vmatpush.bf16.xpose.msra.mxu0 %v2036
    %2046 = vmatmul.bf16.gmra.mxu0 %v2033
    %v2047 = vpop.f32.mrf.mxu0
    %v2048 = vadd.f32 %v394, %v2047
    %v2049 = vpop.f32.mrf.mxu0
    %2050 = vdwg.mxu0
    %2051 = vrot.lane.b32.xlu0 %v924, 32
    %v2052 = vpop.permute.xlu0 %2051
    %2053 = vrot.lane.b32.xlu0 %v929, 32
    %v2054 = vpop.permute.xlu0 %2053
    %v2056 = vsel %vm395, %v2052, 0
    %v2059 = vsel %vm395, %v2054, 0
    %2061 = vmatpush.bf16.xpose.msra.mxu0 0
    %2062 = vmatpush.bf16.xpose.msra.mxu0 0
    %2063 = vmatpush.bf16.xpose.msra.mxu0 0
    %2064 = vmatpush.bf16.xpose.msra.mxu0 0
    %2065 = vmatpush.bf16.xpose.msra.mxu0 0
    %2066 = vmatpush.bf16.xpose.msra.mxu0 0
    %2067 = vmatpush.bf16.xpose.msra.mxu0 0
    %2068 = vmatpush.bf16.xpose.msra.mxu0 %v2059
    %2069 = vmatmul.bf16.gmra.mxu0 %v2056
    %v2070 = vpop.f32.mrf.mxu0
    %v2071 = vadd.f32 %v394, %v2070
    %v2072 = vpop.f32.mrf.mxu0
    %2073 = vdwg.mxu0
    %2074 = vrot.lane.b32.xlu0 %v953, 32
    %v2075 = vpop.permute.xlu0 %2074
    %2076 = vrot.lane.b32.xlu0 %v958, 32
    %v2077 = vpop.permute.xlu0 %2076
    %v2079 = vsel %vm395, %v2075, 0
    %v2082 = vsel %vm395, %v2077, 0
    %2084 = vmatpush.bf16.xpose.msra.mxu0 0
    %2085 = vmatpush.bf16.xpose.msra.mxu0 0
    %2086 = vmatpush.bf16.xpose.msra.mxu0 0
    %2087 = vmatpush.bf16.xpose.msra.mxu0 0
    %2088 = vmatpush.bf16.xpose.msra.mxu0 0
    %2089 = vmatpush.bf16.xpose.msra.mxu0 0
    %2090 = vmatpush.bf16.xpose.msra.mxu0 0
    %2091 = vmatpush.bf16.xpose.msra.mxu0 %v2082
    %2092 = vmatmul.bf16.gmra.mxu0 %v2079
    %v2093 = vpop.f32.mrf.mxu0
    %v2094 = vadd.f32 %v394, %v2093
    %v2095 = vpop.f32.mrf.mxu0
    %2096 = vdwg.mxu0
    %2097 = vrot.lane.b32.xlu0 %v982, 32
    %v2098 = vpop.permute.xlu0 %2097
    %2099 = vrot.lane.b32.xlu0 %v987, 32
    %v2100 = vpop.permute.xlu0 %2099
    %v2102 = vsel %vm395, %v2098, 0
    %v2105 = vsel %vm395, %v2100, 0
    %2107 = vmatpush.bf16.xpose.msra.mxu0 0
    %2108 = vmatpush.bf16.xpose.msra.mxu0 0
    %2109 = vmatpush.bf16.xpose.msra.mxu0 0
    %2110 = vmatpush.bf16.xpose.msra.mxu0 0
    %2111 = vmatpush.bf16.xpose.msra.mxu0 0
    %2112 = vmatpush.bf16.xpose.msra.mxu0 0
    %2113 = vmatpush.bf16.xpose.msra.mxu0 0
    %2114 = vmatpush.bf16.xpose.msra.mxu0 %v2105
    %2115 = vmatmul.bf16.gmra.mxu0 %v2102
    %v2116 = vpop.f32.mrf.mxu0
    %v2117 = vadd.f32 %v394, %v2116
    %v2118 = vpop.f32.mrf.mxu0
    %2119 = vdwg.mxu0
    %2120 = vrot.lane.b32.xlu0 %v1011, 32
    %v2121 = vpop.permute.xlu0 %2120
    %2122 = vrot.lane.b32.xlu0 %v1016, 32
    %v2123 = vpop.permute.xlu0 %2122
    %v2125 = vsel %vm395, %v2121, 0
    %v2128 = vsel %vm395, %v2123, 0
    %2130 = vmatpush.bf16.xpose.msra.mxu0 0
    %2131 = vmatpush.bf16.xpose.msra.mxu0 0
    %2132 = vmatpush.bf16.xpose.msra.mxu0 0
    %2133 = vmatpush.bf16.xpose.msra.mxu0 0
    %2134 = vmatpush.bf16.xpose.msra.mxu0 0
    %2135 = vmatpush.bf16.xpose.msra.mxu0 0
    %2136 = vmatpush.bf16.xpose.msra.mxu0 0
    %2137 = vmatpush.bf16.xpose.msra.mxu0 %v2128
    %2138 = vmatmul.bf16.gmra.mxu0 %v2125
    %v2139 = vpop.f32.mrf.mxu0
    %v2140 = vadd.f32 %v394, %v2139
    %v2141 = vpop.f32.mrf.mxu0
    %2142 = vdwg.mxu0
    %v2143 = vsel %vm548, %v1979, -inf
    %2144 = vmax.xlane.f32.xlu0 %v2143
    %v2145 = vpop.xlane.xlu0 %2144
    %v2146 = vsel %vm548, %v2002, -inf
    %2147 = vmax.xlane.f32.xlu0 %v2146
    %v2148 = vpop.xlane.xlu0 %2147
    %v2149 = vsel %vm548, %v2025, -inf
    %2150 = vmax.xlane.f32.xlu0 %v2149
    %v2151 = vpop.xlane.xlu0 %2150
    %v2152 = vsel %vm548, %v2048, -inf
    %2153 = vmax.xlane.f32.xlu0 %v2152
    %v2154 = vpop.xlane.xlu0 %2153
    %v2155 = vsel %vm548, %v2071, -inf
    %2156 = vmax.xlane.f32.xlu0 %v2155
    %v2157 = vpop.xlane.xlu0 %2156
    %v2158 = vsel %vm548, %v2094, -inf
    %2159 = vmax.xlane.f32.xlu0 %v2158
    %v2160 = vpop.xlane.xlu0 %2159
    %v2161 = vsel %vm548, %v2117, -inf
    %2162 = vmax.xlane.f32.xlu0 %v2161
    %v2163 = vpop.xlane.xlu0 %2162
    %v2164 = vsel %vm548, %v2140, -inf
    %2165 = vmax.xlane.f32.xlu0 %v2164
    %v2166 = vpop.xlane.xlu0 %2165
    %v2167 = vsub.f32 %v1979, %v2145
    %v2168 = vsub.f32 %v2002, %v2148
    %v2169 = vsub.f32 %v2025, %v2151
    %v2170 = vsub.f32 %v2048, %v2154
    %v2171 = vsub.f32 %v2071, %v2157
    %v2172 = vsub.f32 %v2094, %v2160
    %v2173 = vsub.f32 %v2117, %v2163
    %v2174 = vsub.f32 %v2140, %v2166
    %v2175 = vmul.f32 %v2167, 1.442695
    %v2176 = vpow.pop %v2175
    %v2177 = vmul.f32 %v2168, 1.442695
    %v2178 = vpow.pop %v2177
    %v2179 = vmul.f32 %v2169, 1.442695
    %v2180 = vpow.pop %v2179
    %v2181 = vmul.f32 %v2170, 1.442695
    %v2182 = vpow.pop %v2181
    %v2183 = vmul.f32 %v2171, 1.442695
    %v2184 = vpow.pop %v2183
    %v2185 = vmul.f32 %v2172, 1.442695
    %v2186 = vpow.pop %v2185
    %v2187 = vmul.f32 %v2173, 1.442695
    %v2188 = vpow.pop %v2187
    %v2189 = vmul.f32 %v2174, 1.442695
    %v2190 = vpow.pop %v2189
    %v2191 = vsel %vm548, %v2176, 0.0
    %2192 = vadd.xlane.f32.xlu0 %v2191
    %v2193 = vpop.xlane.xlu0 %2192
    %v2194 = vsel %vm548, %v2178, 0.0
    %2195 = vadd.xlane.f32.xlu0 %v2194
    %v2196 = vpop.xlane.xlu0 %2195
    %v2197 = vsel %vm548, %v2180, 0.0
    %2198 = vadd.xlane.f32.xlu0 %v2197
    %v2199 = vpop.xlane.xlu0 %2198
    %v2200 = vsel %vm548, %v2182, 0.0
    %2201 = vadd.xlane.f32.xlu0 %v2200
    %v2202 = vpop.xlane.xlu0 %2201
    %v2203 = vsel %vm548, %v2184, 0.0
    %2204 = vadd.xlane.f32.xlu0 %v2203
    %v2205 = vpop.xlane.xlu0 %2204
    %v2206 = vsel %vm548, %v2186, 0.0
    %2207 = vadd.xlane.f32.xlu0 %v2206
    %v2208 = vpop.xlane.xlu0 %2207
    %v2209 = vsel %vm548, %v2188, 0.0
    %2210 = vadd.xlane.f32.xlu0 %v2209
    %v2211 = vpop.xlane.xlu0 %2210
    %v2212 = vsel %vm548, %v2190, 0.0
    %2213 = vadd.xlane.f32.xlu0 %v2212
    %v2214 = vpop.xlane.xlu0 %2213
    %v2215 = vrcp.pop %v2193
    %v2216 = vrcp.pop %v2196
    %v2217 = vrcp.pop %v2199
    %v2218 = vrcp.pop %v2202
    %v2219 = vrcp.pop %v2205
    %v2220 = vrcp.pop %v2208
    %v2221 = vrcp.pop %v2211
    %v2222 = vrcp.pop %v2214
    %v2223 = vmul.f32 %v2176, %v2215
    %v2224 = vmul.f32 %v2178, %v2216
    %v2225 = vmul.f32 %v2180, %v2217
    %v2226 = vmul.f32 %v2182, %v2218
    %v2227 = vmul.f32 %v2184, %v2219
    %v2228 = vmul.f32 %v2186, %v2220
    %v2229 = vmul.f32 %v2188, %v2221
    %v2230 = vmul.f32 %v2190, %v2222
    %v2231 = vpack.c.bf16 %v2223, %v2223
    %v2232 = vpack.c.bf16 %v2224, %v2224
    %v2233 = vpack.c.bf16 %v2225, %v2225
    %v2234 = vpack.c.bf16 %v2226, %v2226
    %v2235 = vpack.c.bf16 %v2227, %v2227
    %v2236 = vpack.c.bf16 %v2228, %v2228
    %v2237 = vpack.c.bf16 %v2229, %v2229
    %v2238 = vpack.c.bf16 %v2230, %v2230
    %2239 = vrot.lane.b32.xlu0 %v1136, 32
    %v2240 = vpop.permute.xlu0 %2239
    %v2242 = vsel %vm548, %v2231, 0
    %v2245 = vsel %vm648, %v2240, 0
    %2247 = vmatpush.bf16.msra.mxu0 0
    %2248 = vmatpush.bf16.msra.mxu0 0
    %2249 = vmatpush.bf16.msra.mxu0 0
    %2250 = vmatpush.bf16.msra.mxu0 0
    %2251 = vmatpush.bf16.msra.mxu0 0
    %2252 = vmatpush.bf16.msra.mxu0 0
    %2253 = vmatpush.bf16.msra.mxu0 0
    %2254 = vmatpush.bf16.msra.mxu0 %v2245
    %2255 = vmatmul.bf16.gmra.mxu0 %v2242
    %v2256 = vpop.f32.mrf.mxu0
    %v2257 = vadd.f32 0.0, %v2256
    %v2258 = vpop.f32.mrf.mxu0
    %2259 = vdwg.mxu0
    %2260 = vrot.lane.b32.xlu0 %v1160, 32
    %v2261 = vpop.permute.xlu0 %2260
    %v2263 = vsel %vm548, %v2232, 0
    %v2266 = vsel %vm648, %v2261, 0
    %2268 = vmatpush.bf16.msra.mxu0 0
    %2269 = vmatpush.bf16.msra.mxu0 0
    %2270 = vmatpush.bf16.msra.mxu0 0
    %2271 = vmatpush.bf16.msra.mxu0 0
    %2272 = vmatpush.bf16.msra.mxu0 0
    %2273 = vmatpush.bf16.msra.mxu0 0
    %2274 = vmatpush.bf16.msra.mxu0 0
    %2275 = vmatpush.bf16.msra.mxu0 %v2266
    %2276 = vmatmul.bf16.gmra.mxu0 %v2263
    %v2277 = vpop.f32.mrf.mxu0
    %v2278 = vadd.f32 0.0, %v2277
    %v2279 = vpop.f32.mrf.mxu0
    %2280 = vdwg.mxu0
    %2281 = vrot.lane.b32.xlu0 %v1184, 32
    %v2282 = vpop.permute.xlu0 %2281
    %v2284 = vsel %vm548, %v2233, 0
    %v2287 = vsel %vm648, %v2282, 0
    %2289 = vmatpush.bf16.msra.mxu0 0
    %2290 = vmatpush.bf16.msra.mxu0 0
    %2291 = vmatpush.bf16.msra.mxu0 0
    %2292 = vmatpush.bf16.msra.mxu0 0
    %2293 = vmatpush.bf16.msra.mxu0 0
    %2294 = vmatpush.bf16.msra.mxu0 0
    %2295 = vmatpush.bf16.msra.mxu0 0
    %2296 = vmatpush.bf16.msra.mxu0 %v2287
    %2297 = vmatmul.bf16.gmra.mxu0 %v2284
    %v2298 = vpop.f32.mrf.mxu0
    %v2299 = vadd.f32 0.0, %v2298
    %v2300 = vpop.f32.mrf.mxu0
    %2301 = vdwg.mxu0
    %2302 = vrot.lane.b32.xlu0 %v1208, 32
    %v2303 = vpop.permute.xlu0 %2302
    %v2305 = vsel %vm548, %v2234, 0
    %v2308 = vsel %vm648, %v2303, 0
    %2310 = vmatpush.bf16.msra.mxu0 0
    %2311 = vmatpush.bf16.msra.mxu0 0
    %2312 = vmatpush.bf16.msra.mxu0 0
    %2313 = vmatpush.bf16.msra.mxu0 0
    %2314 = vmatpush.bf16.msra.mxu0 0
    %2315 = vmatpush.bf16.msra.mxu0 0
    %2316 = vmatpush.bf16.msra.mxu0 0
    %2317 = vmatpush.bf16.msra.mxu0 %v2308
    %2318 = vmatmul.bf16.gmra.mxu0 %v2305
    %v2319 = vpop.f32.mrf.mxu0
    %v2320 = vadd.f32 0.0, %v2319
    %v2321 = vpop.f32.mrf.mxu0
    %2322 = vdwg.mxu0
    %2323 = vrot.lane.b32.xlu0 %v1232, 32
    %v2324 = vpop.permute.xlu0 %2323
    %v2326 = vsel %vm548, %v2235, 0
    %v2329 = vsel %vm648, %v2324, 0
    %2331 = vmatpush.bf16.msra.mxu0 0
    %2332 = vmatpush.bf16.msra.mxu0 0
    %2333 = vmatpush.bf16.msra.mxu0 0
    %2334 = vmatpush.bf16.msra.mxu0 0
    %2335 = vmatpush.bf16.msra.mxu0 0
    %2336 = vmatpush.bf16.msra.mxu0 0
    %2337 = vmatpush.bf16.msra.mxu0 0
    %2338 = vmatpush.bf16.msra.mxu0 %v2329
    %2339 = vmatmul.bf16.gmra.mxu0 %v2326
    %v2340 = vpop.f32.mrf.mxu0
    %v2341 = vadd.f32 0.0, %v2340
    %v2342 = vpop.f32.mrf.mxu0
    %2343 = vdwg.mxu0
    %2344 = vrot.lane.b32.xlu0 %v1256, 32
    %v2345 = vpop.permute.xlu0 %2344
    %v2347 = vsel %vm548, %v2236, 0
    %v2350 = vsel %vm648, %v2345, 0
    %2352 = vmatpush.bf16.msra.mxu0 0
    %2353 = vmatpush.bf16.msra.mxu0 0
    %2354 = vmatpush.bf16.msra.mxu0 0
    %2355 = vmatpush.bf16.msra.mxu0 0
    %2356 = vmatpush.bf16.msra.mxu0 0
    %2357 = vmatpush.bf16.msra.mxu0 0
    %2358 = vmatpush.bf16.msra.mxu0 0
    %2359 = vmatpush.bf16.msra.mxu0 %v2350
    %2360 = vmatmul.bf16.gmra.mxu0 %v2347
    %v2361 = vpop.f32.mrf.mxu0
    %v2362 = vadd.f32 0.0, %v2361
    %v2363 = vpop.f32.mrf.mxu0
    %2364 = vdwg.mxu0
    %2365 = vrot.lane.b32.xlu0 %v1280, 32
    %v2366 = vpop.permute.xlu0 %2365
    %v2368 = vsel %vm548, %v2237, 0
    %v2371 = vsel %vm648, %v2366, 0
    %2373 = vmatpush.bf16.msra.mxu0 0
    %2374 = vmatpush.bf16.msra.mxu0 0
    %2375 = vmatpush.bf16.msra.mxu0 0
    %2376 = vmatpush.bf16.msra.mxu0 0
    %2377 = vmatpush.bf16.msra.mxu0 0
    %2378 = vmatpush.bf16.msra.mxu0 0
    %2379 = vmatpush.bf16.msra.mxu0 0
    %2380 = vmatpush.bf16.msra.mxu0 %v2371
    %2381 = vmatmul.bf16.gmra.mxu0 %v2368
    %v2382 = vpop.f32.mrf.mxu0
    %v2383 = vadd.f32 0.0, %v2382
    %v2384 = vpop.f32.mrf.mxu0
    %2385 = vdwg.mxu0
    %2386 = vrot.lane.b32.xlu0 %v1304, 32
    %v2387 = vpop.permute.xlu0 %2386
    %v2389 = vsel %vm548, %v2238, 0
    %v2392 = vsel %vm648, %v2387, 0
    %2394 = vmatpush.bf16.msra.mxu0 0
    %2395 = vmatpush.bf16.msra.mxu0 0
    %2396 = vmatpush.bf16.msra.mxu0 0
    %2397 = vmatpush.bf16.msra.mxu0 0
    %2398 = vmatpush.bf16.msra.mxu0 0
    %2399 = vmatpush.bf16.msra.mxu0 0
    %2400 = vmatpush.bf16.msra.mxu0 0
    %2401 = vmatpush.bf16.msra.mxu0 %v2392
    %2402 = vmatmul.bf16.gmra.mxu0 %v2389
    %v2403 = vpop.f32.mrf.mxu0
    %v2404 = vadd.f32 0.0, %v2403
    %v2405 = vpop.f32.mrf.mxu0
    %2406 = vdwg.mxu0
    %v2407 = vpack.c.bf16 %v2278, %v2257
    %v2408 = vpack.c.bf16 %v2320, %v2299
    %v2409 = vpack.c.bf16 %v2362, %v2341
    %v2410 = vpack.c.bf16 %v2404, %v2383
    %s2411 = scalar_lea.vmem %s7, 48
    %v2412 = vld [vmem:[%s2411] sm:$0xf]
    %v2413 = vld [vmem:[%s2411 + $0x4] sm:$0xf]
    %v2414 = vld [vmem:[%s2411 + $0x8] sm:$0xf]
    %v2415 = vld [vmem:[%s2411 + $0xc] sm:$0xf]
    %v2420 = vunpack.c.l.b16 %v2412
    %v2421 = vunpack.c.l.b16 %v2413
    %v2422 = vunpack.c.l.b16 %v2414
    %v2423 = vunpack.c.l.b16 %v2415
    %v2424 = vpack.c.b16 %v2421, %v2420
    %v2425 = vpack.c.b16 %v2423, %v2422
    %v2429 = vsel %vm395, %v2407, 0
    %v2432 = vsel %vm395, %v2408, 0
    %v2435 = vsel %vm395, %v2409, 0
    %v2438 = vsel %vm395, %v2410, 0
    %2440 = vmatpush.bf16.msra.mxu0 0
    %2441 = vmatpush.bf16.msra.mxu0 0
    %2442 = vmatpush.bf16.msra.mxu0 0
    %2443 = vmatpush.bf16.msra.mxu0 0
    %2444 = vmatpush.bf16.msra.mxu0 0
    %2445 = vmatpush.bf16.msra.mxu0 0
    %2446 = vmatpush.bf16.msra.mxu0 %v2425
    %2447 = vmatpush.bf16.msra.mxu0 %v2424
    %2448 = vmatmul.bf16.gmra.mxu0 %v2429
    %v2449 = vpop.f32.mrf.mxu0
    %v2450 = vadd.f32 0.0, %v2449
    %v2451 = vpop.f32.mrf.mxu0
    %v2452 = vadd.f32 0.0, %v2451
    %2453 = vmatmul.bf16.gmra.mxu0 %v2432
    %v2454 = vpop.f32.mrf.mxu0
    %v2455 = vadd.f32 0.0, %v2454
    %v2456 = vpop.f32.mrf.mxu0
    %v2457 = vadd.f32 0.0, %v2456
    %2458 = vmatmul.bf16.gmra.mxu0 %v2435
    %v2459 = vpop.f32.mrf.mxu0
    %v2460 = vadd.f32 0.0, %v2459
    %v2461 = vpop.f32.mrf.mxu0
    %v2462 = vadd.f32 0.0, %v2461
    %2463 = vmatmul.bf16.gmra.mxu0 %v2438
    %v2464 = vpop.f32.mrf.mxu0
    %v2465 = vadd.f32 0.0, %v2464
    %v2466 = vpop.f32.mrf.mxu0
    %v2467 = vadd.f32 0.0, %v2466
    %2468 = vdwg.mxu0
    %v2469 = vadd.f32 %v1951, %v2450
    %v2470 = vadd.f32 %v1952, %v2452
    %v2471 = vadd.f32 %v1953, %v2455
    %v2472 = vadd.f32 %v1954, %v2457
    %v2473 = vadd.f32 %v1955, %v2460
    %v2474 = vadd.f32 %v1956, %v2462
    %v2475 = vadd.f32 %v1957, %v2465
    %v2476 = vadd.f32 %v1958, %v2467
    %v2477 = vld [vmem:[%s11] sm:$0x1]
    %v2479 = vperm.slane %v2477, 0
    %v2481 = vadd.f32 %v2469, %v2479
    %v2482 = vadd.f32 %v2470, %v2479
    %v2483 = vadd.f32 %v2471, %v2479
    %v2484 = vadd.f32 %v2472, %v2479
    %v2485 = vadd.f32 %v2473, %v2479
    %v2486 = vadd.f32 %v2474, %v2479
    %v2487 = vadd.f32 %v2475, %v2479
    %v2488 = vadd.f32 %v2476, %v2479
    %2489 = vst [vmem:[#allocation2] sm:$0xff] %v2481
    %2490 = vst [vmem:[#allocation2 + $0x8] sm:$0xff] %v2482
    %2491 = vst [vmem:[#allocation2 + $0x10] sm:$0xff] %v2483
    %2492 = vst [vmem:[#allocation2 + $0x18] sm:$0xff] %v2484
    %2493 = vst [vmem:[#allocation2 + $0x20] sm:$0xff] %v2485
    %2494 = vst [vmem:[#allocation2 + $0x28] sm:$0xff] %v2486
    %2495 = vst [vmem:[#allocation2 + $0x30] sm:$0xff] %v2487
    %2496 = vst [vmem:[#allocation2 + $0x38] sm:$0xff] %v2488
    // Predicated region
    $region50: #{multi_head_attention.1} parent=1 // pred_check
      _
    $region51: #{multi_head_attention.1} parent=1 // pred_check_branch
      %2498 = sbr.rel (0) target = $region53
    $region52: #{multi_head_attention.1} parent=1 // pred_region
      %2500 = vsyncadd [#allocation3], 0
      %s2501 = sshll.u32 [#allocation2], 4
      %s2502 = int_to_ptr.vmem [resolvable:$true] %s2501
      %s2503 = sshll.u32 %s12, 4
      %s2504 = int_to_ptr.hbm [resolvable:$true] %s2503
      %2509 = dma.vmem_to_hbm [thread:$0]  %s2502, 1024, %s2504, [#allocation3], 128, 128, 8
    $region53: #{multi_head_attention.1} parent=1 // pred_fallthru
      _
    // Predicated region
    $region54: #{multi_head_attention.1} parent=1 // pred_check
      _
    $region55: #{multi_head_attention.1} parent=1 // pred_check_branch
      %2511 = sbr.rel (0) target = $region57
    $region56: #{multi_head_attention.1} parent=1 // pred_region
      %2513 = dma.done [#allocation3], 1024
    $region57: #{multi_head_attention.1} parent=1 // pred_fallthru
      _
    %2514 = vsyncpa [#allocation3], 1

</llo_original>
